<compile_context>
chip_gen: v7x
topology: tpu7x:2x2x1
jax: 0.10.0
libtpu: 0.0.40
codegen_flags: <defaults>
</compile_context>

<pallas_src>
import jax
import jax.numpy as jnp
from jax.experimental import pallas as pl
from jax.experimental.pallas import tpu as pltpu


# ----------------------------------------------------------------------------
# Fused kernel: num_layers GRU layers (layer-sequential) + Linear + sigmoid head
# ----------------------------------------------------------------------------
def _make_embedder_kernel(num_layers):
    def kernel(*refs):
        x_ref = refs[0]                                        # (T, Bb, F) time-major
        layer_refs = [refs[1 + 4 * l: 1 + 4 * (l + 1)] for l in range(num_layers)]
        wfc_ref, bfc_ref, out_ref = refs[1 + 4 * num_layers:]

        T, Bb, F = x_ref.shape
        H = wfc_ref.shape[0]

        # Time-major 2-D view: row index = t*Bb + b.  Layout-preserving collapse
        # (Bb is a multiple of 8 f32 sublanes; lane dim unchanged).
        seq = x_ref[...].reshape(T * Bb, F)

        for l in range(num_layers):
            wih_ref, whh_ref, bx_ref, bhn_ref = layer_refs[l]
            whh = whh_ref[...]                                 # (H, 3H) gate-fused
            bhn = bhn_ref[...]                                 # (1, H)  (b_hn)

            # ---- Layer prologue: ONE batched input projection over all T ----
            # bx already holds (b_ih + b_hh) for r/z and b_in only for n.
            gi = (jnp.dot(seq, wih_ref[...], preferred_element_type=jnp.float32)
                  + bx_ref[...])                               # (T*Bb, 3H)

            # ---- Serial recurrence: one fused MXU dot per step --------------
            h = jnp.zeros((Bb, H), jnp.float32)                # PyTorch h0 = 0
            outs = []
            for t in range(T):                                 # fully unrolled (toy T)
                gi_t = gi[t * Bb:(t + 1) * Bb, :]              # contiguous (Bb, 3H) slab
                gh = jnp.dot(h, whh, preferred_element_type=jnp.float32)
                r = jax.nn.sigmoid(gi_t[:, 0:H] + gh[:, 0:H])
                z = jax.nn.sigmoid(gi_t[:, H:2 * H] + gh[:, H:2 * H])
                n = jnp.tanh(gi_t[:, 2 * H:] + r * (gh[:, 2 * H:] + bhn))
                h = (1.0 - z) * n + z * h
                outs.append(h)

            # Hidden sequence stays in vregs; time-major stack for next layer.
            seq = jnp.concatenate(outs, axis=0)                # (T*Bb, H)

        # ---- Epilogue: fused Linear + sigmoid head (one batched MXU matmul) --
        y = jax.nn.sigmoid(
            jnp.dot(seq, wfc_ref[...], preferred_element_type=jnp.float32)
            + bfc_ref[...])                                    # (T*Bb, H)

        # Lane-dense output slab: out[b, t*H:(t+1)*H] = y[t*Bb + b].
        # T*H is a multiple of 128 -> unmasked vst writeback.
        out_ref[...] = jnp.concatenate(
            [y[t * Bb:(t + 1) * Bb, :] for t in range(T)], axis=-1)

    return kernel


def _embedder_pallas(x, kparams, *, b_block=8):
    B, T, F = x.shape
    num_layers = len(kparams["layers"])
    H = kparams["w_fc"].shape[0]

    # Pad batch to a multiple of the f32 sublane count (occupancy: a (2,32)
    # gate tile fills ~6% of a vreg; padding to 8 rows is effectively free).
    B_pad = ((max(B, b_block) + b_block - 1) // b_block) * b_block
    if B_pad != B:
        x = jnp.pad(x, ((0, B_pad - B), (0, 0), (0, 0)))
    # Time-major so each per-timestep slab is a contiguous sublane group.
    x_tm = jnp.transpose(x, (1, 0, 2))                         # (T, B_pad, F)

    grid = (B_pad // b_block,)                                 # batch-parallel grid

    inputs = [x_tm]
    in_specs = [pl.BlockSpec((T, b_block, F), lambda b: (0, b, 0))]
    for (wih, whh, bx, bhn) in kparams["layers"]:
        inputs += [wih, whh, bx, bhn]
        in_specs += [
            pl.BlockSpec(wih.shape, lambda b: (0, 0)),         # (in, 3H) gate-fused
            pl.BlockSpec(whh.shape, lambda b: (0, 0)),         # (H, 3H) gate-fused
            pl.BlockSpec(bx.shape, lambda b: (0, 0)),          # (1, 3H)
            pl.BlockSpec(bhn.shape, lambda b: (0, 0)),         # (1, H)
        ]
    inputs += [kparams["w_fc"], kparams["b_fc"]]
    in_specs += [
        pl.BlockSpec(kparams["w_fc"].shape, lambda b: (0, 0)),
        pl.BlockSpec(kparams["b_fc"].shape, lambda b: (0, 0)),
    ]

    out = pl.pallas_call(
        _make_embedder_kernel(num_layers),
        out_shape=jax.ShapeDtypeStruct((B_pad, T * H), jnp.float32),
        grid_spec=pltpu.PrefetchScalarGridSpec(
            num_scalar_prefetch=0,
            grid=grid,
            in_specs=in_specs,
            out_specs=pl.BlockSpec((b_block, T * H), lambda b: (b, 0)),
        ),
        compiler_params=pltpu.CompilerParams(
            dimension_semantics=("parallel",)),
    )(*inputs)

    # Wrapper-side (free) reshape + crop back to batch-first (B, T, H).
    return out.reshape(B_pad, T, H)[:B]


# ----------------------------------------------------------------------------
# Parameter handling: init in PyTorch layout, convert once to kernel layout.
# ----------------------------------------------------------------------------
def init_embedder_params(key, input_features, hidden_dim, num_layers):
    """PyTorch-layout params: weight_ih (3H,in), weight_hh (3H,H), biases (3H,)."""
    bound = 1.0 / (hidden_dim ** 0.5)
    gru = []
    for layer in range(num_layers):
        in_dim = input_features if layer == 0 else hidden_dim
        key, k1, k2, k3, k4 = jax.random.split(key, 5)
        w_ih = jax.random.uniform(k1, (3 * hidden_dim, in_dim), jnp.float32, -bound, bound)
        w_hh = jax.random.uniform(k2, (3 * hidden_dim, hidden_dim), jnp.float32, -bound, bound)
        b_ih = jax.random.uniform(k3, (3 * hidden_dim,), jnp.float32, -bound, bound)
        b_hh = jax.random.uniform(k4, (3 * hidden_dim,), jnp.float32, -bound, bound)
        gru.append((w_ih, w_hh, b_ih, b_hh))
    key, k5, k6 = jax.random.split(key, 3)
    fc_w = jax.random.uniform(k5, (hidden_dim, hidden_dim), jnp.float32, -bound, bound)
    fc_b = jax.random.uniform(k6, (hidden_dim,), jnp.float32, -bound, bound)
    return {"gru": gru, "fc_w": fc_w, "fc_b": fc_b}


def prepare_params(params):
    """PyTorch layout -> gate-fused / bias-folded kernel layout.

    For v6e/v7x production sizes, cast the weight matrices below to bf16 (keep
    f32 accumulation and gate math); kept f32 here so the 1e-5 reference check
    holds and because v5e's VPU/EUP are f32-only.
    """
    layers = []
    for (w_ih, w_hh, b_ih, b_hh) in params["gru"]:
        H = w_hh.shape[1]
        wih_k = jnp.transpose(w_ih)                            # (in, 3H): r|z|n columns
        whh_k = jnp.transpose(w_hh)                            # (H, 3H)
        # r/z: fold b_ih + b_hh.  n: keep b_in here; b_hn stays inside
        # r * (W_hn h + b_hn) per PyTorch GRU semantics.
        bx = jnp.concatenate(
            [b_ih[:2 * H] + b_hh[:2 * H], b_ih[2 * H:]]).reshape(1, 3 * H)
        bhn = b_hh[2 * H:].reshape(1, H)
        layers.append((wih_k, whh_k, bx, bhn))
    return {
        "layers": layers,
        "w_fc": jnp.transpose(params["fc_w"]),                 # (H, H): y = h @ W^T + b
        "b_fc": params["fc_b"].reshape(1, -1),                 # (1, H)
    }


@jax.jit
def embedder_forward(x_btf, params):
    """x_btf: (B, T, F) float32 -> (B, T, H) float32 (batch_first, like PyTorch)."""
    return _embedder_pallas(x_btf, prepare_params(params))


# ----------------------------------------------------------------------------
# Pure-JAX reference (PyTorch GRU semantics) for correctness validation.
# ----------------------------------------------------------------------------
def embedder_reference(x, params):
    B, T, _ = x.shape
    h_seq = x
    for (w_ih, w_hh, b_ih, b_hh) in params["gru"]:
        H = w_hh.shape[1]
        h = jnp.zeros((B, H), jnp.float32)
        outs = []
        for t in range(T):
            x_t = h_seq[:, t, :]
            gi = x_t @ w_ih.T + b_ih
            gh = h @ w_hh.T + b_hh
            r = jax.nn.sigmoid(gi[:, :H] + gh[:, :H])
            z = jax.nn.sigmoid(gi[:, H:2 * H] + gh[:, H:2 * H])
            n = jnp.tanh(gi[:, 2 * H:] + r * gh[:, 2 * H:])
            h = (1.0 - z) * n + z * h
            outs.append(h)
        h_seq = jnp.stack(outs, axis=1)
    return jax.nn.sigmoid(h_seq @ params["fc_w"].T + params["fc_b"])


if __name__ == "__main__":
    batch, seq_len, input_features, hidden_dim, num_layers = 2, 8, 4, 32, 2

    key = jax.random.PRNGKey(0)
    key, xk, pk = jax.random.split(key, 3)
    x = jax.random.normal(xk, (batch, seq_len, input_features), jnp.float32)
    params = init_embedder_params(pk, input_features, hidden_dim, num_layers)

    out = jax.block_until_ready(embedder_forward(x, params))
    ref = jax.block_until_ready(embedder_reference(x, params))

    assert out.shape == (batch, seq_len, hidden_dim)
    assert bool(jnp.all(jnp.isfinite(out)))
    assert bool(jnp.all((out >= 0.0) & (out <= 1.0)))          # sigmoid output range
    assert bool(jnp.allclose(out, ref, atol=1e-5, rtol=1e-5))  # matches GRU reference
    print("KERNEL_OK")
</pallas_src>

<mosaic_0001>
module attributes {stable_mosaic.version = 11 : i64} {
  func.func @kernel(%arg0: i32, %arg1: memref<8x8x4xf32, #tpu.memory_space<vmem>>, %arg2: memref<4x96xf32, #tpu.memory_space<vmem>>, %arg3: memref<32x96xf32, #tpu.memory_space<vmem>>, %arg4: memref<1x96xf32, #tpu.memory_space<vmem>>, %arg5: memref<1x32xf32, #tpu.memory_space<vmem>>, %arg6: memref<32x96xf32, #tpu.memory_space<vmem>>, %arg7: memref<32x96xf32, #tpu.memory_space<vmem>>, %arg8: memref<1x96xf32, #tpu.memory_space<vmem>>, %arg9: memref<1x32xf32, #tpu.memory_space<vmem>>, %arg10: memref<32x32xf32, #tpu.memory_space<vmem>>, %arg11: memref<1x32xf32, #tpu.memory_space<vmem>>, %arg12: memref<8x256xf32, #tpu.memory_space<vmem>>) attributes {dimension_semantics = [#tpu.dimension_semantics<parallel>], iteration_bounds = array<i64: 1>, scalar_prefetch = 0 : i64, scratch_operands = 0 : i64, tpu.core_type = #tpu.core_type<tc>, window_params = [{transform_indices = @transform_0, window_bounds = array<i64: 8, 8, 4>}, {pipeline_mode = #tpu.pipeline_mode<synchronous>, transform_indices = @transform_1, window_bounds = array<i64: 4, 96>}, {pipeline_mode = #tpu.pipeline_mode<synchronous>, transform_indices = @transform_2, window_bounds = array<i64: 32, 96>}, {pipeline_mode = #tpu.pipeline_mode<synchronous>, transform_indices = @transform_3, window_bounds = array<i64: 1, 96>}, {pipeline_mode = #tpu.pipeline_mode<synchronous>, transform_indices = @transform_4, window_bounds = array<i64: 1, 32>}, {pipeline_mode = #tpu.pipeline_mode<synchronous>, transform_indices = @transform_5, window_bounds = array<i64: 32, 96>}, {pipeline_mode = #tpu.pipeline_mode<synchronous>, transform_indices = @transform_6, window_bounds = array<i64: 32, 96>}, {pipeline_mode = #tpu.pipeline_mode<synchronous>, transform_indices = @transform_7, window_bounds = array<i64: 1, 96>}, {pipeline_mode = #tpu.pipeline_mode<synchronous>, transform_indices = @transform_8, window_bounds = array<i64: 1, 32>}, {pipeline_mode = #tpu.pipeline_mode<synchronous>, transform_indices = @transform_9, window_bounds = array<i64: 32, 32>}, {pipeline_mode = #tpu.pipeline_mode<synchronous>, transform_indices = @transform_10, window_bounds = array<i64: 1, 32>}, {transform_indices = @transform_11, window_bounds = array<i64: 8, 256>}]} {
    %c0 = arith.constant 0 : index
    %c0_0 = arith.constant 0 : index
    %c0_1 = arith.constant 0 : index
    %0 = vector.load %arg1[%c0, %c0_0, %c0_1] : memref<8x8x4xf32, #tpu.memory_space<vmem>>, vector<8x8x4xf32>
    %1 = vector.shape_cast %0 : vector<8x8x4xf32> to vector<64x4xf32>
    %c0_2 = arith.constant 0 : index
    %c0_3 = arith.constant 0 : index
    %2 = vector.load %arg3[%c0_2, %c0_3] : memref<32x96xf32, #tpu.memory_space<vmem>>, vector<32x96xf32>
    %c0_4 = arith.constant 0 : index
    %c0_5 = arith.constant 0 : index
    %3 = vector.load %arg5[%c0_4, %c0_5] : memref<1x32xf32, #tpu.memory_space<vmem>>, vector<1x32xf32>
    %c0_6 = arith.constant 0 : index
    %c0_7 = arith.constant 0 : index
    %4 = vector.load %arg2[%c0_6, %c0_7] : memref<4x96xf32, #tpu.memory_space<vmem>>, vector<4x96xf32>
    %cst = arith.constant dense<0.000000e+00> : vector<64x96xf32>
    %5 = tpu.matmul %1, %4, %cst {dimension_numbers = #tpu.dot_dimension_numbers<[1], [0], [0], [1], [0, 0, 1, 1], [], []>} : vector<64x4xf32>, vector<4x96xf32>, vector<64x96xf32> -> vector<64x96xf32>
    %c0_8 = arith.constant 0 : index
    %c0_9 = arith.constant 0 : index
    %6 = vector.load %arg4[%c0_8, %c0_9] : memref<1x96xf32, #tpu.memory_space<vmem>>, vector<1x96xf32>
    %7 = vector.broadcast %6 : vector<1x96xf32> to vector<64x96xf32>
    %8 = arith.addf %5, %7 : vector<64x96xf32>
    %cst_10 = arith.constant 0.000000e+00 : f32
    %9 = vector.broadcast %cst_10 : f32 to vector<8x32xf32>
    %10 = vector.extract_strided_slice %8 {offsets = [0, 0], sizes = [8, 96], strides = [1, 1]} : vector<64x96xf32> to vector<8x96xf32>
    %cst_11 = arith.constant dense<0.000000e+00> : vector<8x96xf32>
    %11 = tpu.matmul %9, %2, %cst_11 {dimension_numbers = #tpu.dot_dimension_numbers<[1], [0], [0], [1], [0, 0, 1, 1], [], []>} : vector<8x32xf32>, vector<32x96xf32>, vector<8x96xf32> -> vector<8x96xf32>
    %12 = vector.extract_strided_slice %10 {offsets = [0, 0], sizes = [8, 32], strides = [1, 1]} : vector<8x96xf32> to vector<8x32xf32>
    %13 = vector.extract_strided_slice %11 {offsets = [0, 0], sizes = [8, 32], strides = [1, 1]} : vector<8x96xf32> to vector<8x32xf32>
    %14 = arith.addf %12, %13 : vector<8x32xf32>
    %15 = arith.negf %14 : vector<8x32xf32>
    %16 = math.exp %15 : vector<8x32xf32>
    %cst_12 = arith.constant 1.000000e+00 : f32
    %17 = vector.broadcast %cst_12 : f32 to vector<8x32xf32>
    %18 = arith.addf %17, %16 : vector<8x32xf32>
    %19 = arith.divf %17, %18 : vector<8x32xf32>
    %20 = vector.extract_strided_slice %10 {offsets = [0, 32], sizes = [8, 32], strides = [1, 1]} : vector<8x96xf32> to vector<8x32xf32>
    %21 = vector.extract_strided_slice %11 {offsets = [0, 32], sizes = [8, 32], strides = [1, 1]} : vector<8x96xf32> to vector<8x32xf32>
    %22 = arith.addf %20, %21 : vector<8x32xf32>
    %23 = arith.negf %22 : vector<8x32xf32>
    %24 = math.exp %23 : vector<8x32xf32>
    %cst_13 = arith.constant 1.000000e+00 : f32
    %25 = vector.broadcast %cst_13 : f32 to vector<8x32xf32>
    %26 = arith.addf %25, %24 : vector<8x32xf32>
    %27 = arith.divf %25, %26 : vector<8x32xf32>
    %28 = vector.extract_strided_slice %10 {offsets = [0, 64], sizes = [8, 32], strides = [1, 1]} : vector<8x96xf32> to vector<8x32xf32>
    %29 = vector.extract_strided_slice %11 {offsets = [0, 64], sizes = [8, 32], strides = [1, 1]} : vector<8x96xf32> to vector<8x32xf32>
    %30 = vector.broadcast %3 : vector<1x32xf32> to vector<8x32xf32>
    %31 = arith.addf %29, %30 : vector<8x32xf32>
    %32 = arith.mulf %19, %31 : vector<8x32xf32>
    %33 = arith.addf %28, %32 : vector<8x32xf32>
    %34 = math.tanh %33 : vector<8x32xf32>
    %cst_14 = arith.constant 1.000000e+00 : f32
    %35 = vector.broadcast %cst_14 : f32 to vector<8x32xf32>
    %36 = arith.subf %35, %27 : vector<8x32xf32>
    %37 = arith.mulf %36, %34 : vector<8x32xf32>
    %38 = arith.mulf %27, %9 : vector<8x32xf32>
    %39 = arith.addf %37, %38 : vector<8x32xf32>
    %40 = vector.extract_strided_slice %8 {offsets = [8, 0], sizes = [8, 96], strides = [1, 1]} : vector<64x96xf32> to vector<8x96xf32>
    %cst_15 = arith.constant dense<0.000000e+00> : vector<8x96xf32>
    %41 = tpu.matmul %39, %2, %cst_15 {dimension_numbers = #tpu.dot_dimension_numbers<[1], [0], [0], [1], [0, 0, 1, 1], [], []>} : vector<8x32xf32>, vector<32x96xf32>, vector<8x96xf32> -> vector<8x96xf32>
    %42 = vector.extract_strided_slice %40 {offsets = [0, 0], sizes = [8, 32], strides = [1, 1]} : vector<8x96xf32> to vector<8x32xf32>
    %43 = vector.extract_strided_slice %41 {offsets = [0, 0], sizes = [8, 32], strides = [1, 1]} : vector<8x96xf32> to vector<8x32xf32>
    %44 = arith.addf %42, %43 : vector<8x32xf32>
    %45 = arith.negf %44 : vector<8x32xf32>
    %46 = math.exp %45 : vector<8x32xf32>
    %cst_16 = arith.constant 1.000000e+00 : f32
    %47 = vector.broadcast %cst_16 : f32 to vector<8x32xf32>
    %48 = arith.addf %47, %46 : vector<8x32xf32>
    %49 = arith.divf %47, %48 : vector<8x32xf32>
    %50 = vector.extract_strided_slice %40 {offsets = [0, 32], sizes = [8, 32], strides = [1, 1]} : vector<8x96xf32> to vector<8x32xf32>
    %51 = vector.extract_strided_slice %41 {offsets = [0, 32], sizes = [8, 32], strides = [1, 1]} : vector<8x96xf32> to vector<8x32xf32>
    %52 = arith.addf %50, %51 : vector<8x32xf32>
    %53 = arith.negf %52 : vector<8x32xf32>
    %54 = math.exp %53 : vector<8x32xf32>
    %cst_17 = arith.constant 1.000000e+00 : f32
    %55 = vector.broadcast %cst_17 : f32 to vector<8x32xf32>
    %56 = arith.addf %55, %54 : vector<8x32xf32>
    %57 = arith.divf %55, %56 : vector<8x32xf32>
    %58 = vector.extract_strided_slice %40 {offsets = [0, 64], sizes = [8, 32], strides = [1, 1]} : vector<8x96xf32> to vector<8x32xf32>
    %59 = vector.extract_strided_slice %41 {offsets = [0, 64], sizes = [8, 32], strides = [1, 1]} : vector<8x96xf32> to vector<8x32xf32>
    %60 = vector.broadcast %3 : vector<1x32xf32> to vector<8x32xf32>
    %61 = arith.addf %59, %60 : vector<8x32xf32>
    %62 = arith.mulf %49, %61 : vector<8x32xf32>
    %63 = arith.addf %58, %62 : vector<8x32xf32>
    %64 = math.tanh %63 : vector<8x32xf32>
    %cst_18 = arith.constant 1.000000e+00 : f32
    %65 = vector.broadcast %cst_18 : f32 to vector<8x32xf32>
    %66 = arith.subf %65, %57 : vector<8x32xf32>
    %67 = arith.mulf %66, %64 : vector<8x32xf32>
    %68 = arith.mulf %57, %39 : vector<8x32xf32>
    %69 = arith.addf %67, %68 : vector<8x32xf32>
    %70 = vector.extract_strided_slice %8 {offsets = [16, 0], sizes = [8, 96], strides = [1, 1]} : vector<64x96xf32> to vector<8x96xf32>
    %cst_19 = arith.constant dense<0.000000e+00> : vector<8x96xf32>
    %71 = tpu.matmul %69, %2, %cst_19 {dimension_numbers = #tpu.dot_dimension_numbers<[1], [0], [0], [1], [0, 0, 1, 1], [], []>} : vector<8x32xf32>, vector<32x96xf32>, vector<8x96xf32> -> vector<8x96xf32>
    %72 = vector.extract_strided_slice %70 {offsets = [0, 0], sizes = [8, 32], strides = [1, 1]} : vector<8x96xf32> to vector<8x32xf32>
    %73 = vector.extract_strided_slice %71 {offsets = [0, 0], sizes = [8, 32], strides = [1, 1]} : vector<8x96xf32> to vector<8x32xf32>
    %74 = arith.addf %72, %73 : vector<8x32xf32>
    %75 = arith.negf %74 : vector<8x32xf32>
    %76 = math.exp %75 : vector<8x32xf32>
    %cst_20 = arith.constant 1.000000e+00 : f32
    %77 = vector.broadcast %cst_20 : f32 to vector<8x32xf32>
    %78 = arith.addf %77, %76 : vector<8x32xf32>
    %79 = arith.divf %77, %78 : vector<8x32xf32>
    %80 = vector.extract_strided_slice %70 {offsets = [0, 32], sizes = [8, 32], strides = [1, 1]} : vector<8x96xf32> to vector<8x32xf32>
    %81 = vector.extract_strided_slice %71 {offsets = [0, 32], sizes = [8, 32], strides = [1, 1]} : vector<8x96xf32> to vector<8x32xf32>
    %82 = arith.addf %80, %81 : vector<8x32xf32>
    %83 = arith.negf %82 : vector<8x32xf32>
    %84 = math.exp %83 : vector<8x32xf32>
    %cst_21 = arith.constant 1.000000e+00 : f32
    %85 = vector.broadcast %cst_21 : f32 to vector<8x32xf32>
    %86 = arith.addf %85, %84 : vector<8x32xf32>
    %87 = arith.divf %85, %86 : vector<8x32xf32>
    %88 = vector.extract_strided_slice %70 {offsets = [0, 64], sizes = [8, 32], strides = [1, 1]} : vector<8x96xf32> to vector<8x32xf32>
    %89 = vector.extract_strided_slice %71 {offsets = [0, 64], sizes = [8, 32], strides = [1, 1]} : vector<8x96xf32> to vector<8x32xf32>
    %90 = vector.broadcast %3 : vector<1x32xf32> to vector<8x32xf32>
    %91 = arith.addf %89, %90 : vector<8x32xf32>
    %92 = arith.mulf %79, %91 : vector<8x32xf32>
    %93 = arith.addf %88, %92 : vector<8x32xf32>
    %94 = math.tanh %93 : vector<8x32xf32>
    %cst_22 = arith.constant 1.000000e+00 : f32
    %95 = vector.broadcast %cst_22 : f32 to vector<8x32xf32>
    %96 = arith.subf %95, %87 : vector<8x32xf32>
    %97 = arith.mulf %96, %94 : vector<8x32xf32>
    %98 = arith.mulf %87, %69 : vector<8x32xf32>
    %99 = arith.addf %97, %98 : vector<8x32xf32>
    %100 = vector.extract_strided_slice %8 {offsets = [24, 0], sizes = [8, 96], strides = [1, 1]} : vector<64x96xf32> to vector<8x96xf32>
    %cst_23 = arith.constant dense<0.000000e+00> : vector<8x96xf32>
    %101 = tpu.matmul %99, %2, %cst_23 {dimension_numbers = #tpu.dot_dimension_numbers<[1], [0], [0], [1], [0, 0, 1, 1], [], []>} : vector<8x32xf32>, vector<32x96xf32>, vector<8x96xf32> -> vector<8x96xf32>
    %102 = vector.extract_strided_slice %100 {offsets = [0, 0], sizes = [8, 32], strides = [1, 1]} : vector<8x96xf32> to vector<8x32xf32>
    %103 = vector.extract_strided_slice %101 {offsets = [0, 0], sizes = [8, 32], strides = [1, 1]} : vector<8x96xf32> to vector<8x32xf32>
    %104 = arith.addf %102, %103 : vector<8x32xf32>
    %105 = arith.negf %104 : vector<8x32xf32>
    %106 = math.exp %105 : vector<8x32xf32>
    %cst_24 = arith.constant 1.000000e+00 : f32
    %107 = vector.broadcast %cst_24 : f32 to vector<8x32xf32>
    %108 = arith.addf %107, %106 : vector<8x32xf32>
    %109 = arith.divf %107, %108 : vector<8x32xf32>
    %110 = vector.extract_strided_slice %100 {offsets = [0, 32], sizes = [8, 32], strides = [1, 1]} : vector<8x96xf32> to vector<8x32xf32>
    %111 = vector.extract_strided_slice %101 {offsets = [0, 32], sizes = [8, 32], strides = [1, 1]} : vector<8x96xf32> to vector<8x32xf32>
    %112 = arith.addf %110, %111 : vector<8x32xf32>
    %113 = arith.negf %112 : vector<8x32xf32>
    %114 = math.exp %113 : vector<8x32xf32>
    %cst_25 = arith.constant 1.000000e+00 : f32
    %115 = vector.broadcast %cst_25 : f32 to vector<8x32xf32>
    %116 = arith.addf %115, %114 : vector<8x32xf32>
    %117 = arith.divf %115, %116 : vector<8x32xf32>
    %118 = vector.extract_strided_slice %100 {offsets = [0, 64], sizes = [8, 32], strides = [1, 1]} : vector<8x96xf32> to vector<8x32xf32>
    %119 = vector.extract_strided_slice %101 {offsets = [0, 64], sizes = [8, 32], strides = [1, 1]} : vector<8x96xf32> to vector<8x32xf32>
    %120 = vector.broadcast %3 : vector<1x32xf32> to vector<8x32xf32>
    %121 = arith.addf %119, %120 : vector<8x32xf32>
    %122 = arith.mulf %109, %121 : vector<8x32xf32>
    %123 = arith.addf %118, %122 : vector<8x32xf32>
    %124 = math.tanh %123 : vector<8x32xf32>
    %cst_26 = arith.constant 1.000000e+00 : f32
    %125 = vector.broadcast %cst_26 : f32 to vector<8x32xf32>
    %126 = arith.subf %125, %117 : vector<8x32xf32>
    %127 = arith.mulf %126, %124 : vector<8x32xf32>
    %128 = arith.mulf %117, %99 : vector<8x32xf32>
    %129 = arith.addf %127, %128 : vector<8x32xf32>
    %130 = vector.extract_strided_slice %8 {offsets = [32, 0], sizes = [8, 96], strides = [1, 1]} : vector<64x96xf32> to vector<8x96xf32>
    %cst_27 = arith.constant dense<0.000000e+00> : vector<8x96xf32>
    %131 = tpu.matmul %129, %2, %cst_27 {dimension_numbers = #tpu.dot_dimension_numbers<[1], [0], [0], [1], [0, 0, 1, 1], [], []>} : vector<8x32xf32>, vector<32x96xf32>, vector<8x96xf32> -> vector<8x96xf32>
    %132 = vector.extract_strided_slice %130 {offsets = [0, 0], sizes = [8, 32], strides = [1, 1]} : vector<8x96xf32> to vector<8x32xf32>
    %133 = vector.extract_strided_slice %131 {offsets = [0, 0], sizes = [8, 32], strides = [1, 1]} : vector<8x96xf32> to vector<8x32xf32>
    %134 = arith.addf %132, %133 : vector<8x32xf32>
    %135 = arith.negf %134 : vector<8x32xf32>
    %136 = math.exp %135 : vector<8x32xf32>
    %cst_28 = arith.constant 1.000000e+00 : f32
    %137 = vector.broadcast %cst_28 : f32 to vector<8x32xf32>
    %138 = arith.addf %137, %136 : vector<8x32xf32>
    %139 = arith.divf %137, %138 : vector<8x32xf32>
    %140 = vector.extract_strided_slice %130 {offsets = [0, 32], sizes = [8, 32], strides = [1, 1]} : vector<8x96xf32> to vector<8x32xf32>
    %141 = vector.extract_strided_slice %131 {offsets = [0, 32], sizes = [8, 32], strides = [1, 1]} : vector<8x96xf32> to vector<8x32xf32>
    %142 = arith.addf %140, %141 : vector<8x32xf32>
    %143 = arith.negf %142 : vector<8x32xf32>
    %144 = math.exp %143 : vector<8x32xf32>
    %cst_29 = arith.constant 1.000000e+00 : f32
    %145 = vector.broadcast %cst_29 : f32 to vector<8x32xf32>
    %146 = arith.addf %145, %144 : vector<8x32xf32>
    %147 = arith.divf %145, %146 : vector<8x32xf32>
    %148 = vector.extract_strided_slice %130 {offsets = [0, 64], sizes = [8, 32], strides = [1, 1]} : vector<8x96xf32> to vector<8x32xf32>
    %149 = vector.extract_strided_slice %131 {offsets = [0, 64], sizes = [8, 32], strides = [1, 1]} : vector<8x96xf32> to vector<8x32xf32>
    %150 = vector.broadcast %3 : vector<1x32xf32> to vector<8x32xf32>
    %151 = arith.addf %149, %150 : vector<8x32xf32>
    %152 = arith.mulf %139, %151 : vector<8x32xf32>
    %153 = arith.addf %148, %152 : vector<8x32xf32>
    %154 = math.tanh %153 : vector<8x32xf32>
    %cst_30 = arith.constant 1.000000e+00 : f32
    %155 = vector.broadcast %cst_30 : f32 to vector<8x32xf32>
    %156 = arith.subf %155, %147 : vector<8x32xf32>
    %157 = arith.mulf %156, %154 : vector<8x32xf32>
    %158 = arith.mulf %147, %129 : vector<8x32xf32>
    %159 = arith.addf %157, %158 : vector<8x32xf32>
    %160 = vector.extract_strided_slice %8 {offsets = [40, 0], sizes = [8, 96], strides = [1, 1]} : vector<64x96xf32> to vector<8x96xf32>
    %cst_31 = arith.constant dense<0.000000e+00> : vector<8x96xf32>
    %161 = tpu.matmul %159, %2, %cst_31 {dimension_numbers = #tpu.dot_dimension_numbers<[1], [0], [0], [1], [0, 0, 1, 1], [], []>} : vector<8x32xf32>, vector<32x96xf32>, vector<8x96xf32> -> vector<8x96xf32>
    %162 = vector.extract_strided_slice %160 {offsets = [0, 0], sizes = [8, 32], strides = [1, 1]} : vector<8x96xf32> to vector<8x32xf32>
    %163 = vector.extract_strided_slice %161 {offsets = [0, 0], sizes = [8, 32], strides = [1, 1]} : vector<8x96xf32> to vector<8x32xf32>
    %164 = arith.addf %162, %163 : vector<8x32xf32>
    %165 = arith.negf %164 : vector<8x32xf32>
    %166 = math.exp %165 : vector<8x32xf32>
    %cst_32 = arith.constant 1.000000e+00 : f32
    %167 = vector.broadcast %cst_32 : f32 to vector<8x32xf32>
    %168 = arith.addf %167, %166 : vector<8x32xf32>
    %169 = arith.divf %167, %168 : vector<8x32xf32>
    %170 = vector.extract_strided_slice %160 {offsets = [0, 32], sizes = [8, 32], strides = [1, 1]} : vector<8x96xf32> to vector<8x32xf32>
    %171 = vector.extract_strided_slice %161 {offsets = [0, 32], sizes = [8, 32], strides = [1, 1]} : vector<8x96xf32> to vector<8x32xf32>
    %172 = arith.addf %170, %171 : vector<8x32xf32>
    %173 = arith.negf %172 : vector<8x32xf32>
    %174 = math.exp %173 : vector<8x32xf32>
    %cst_33 = arith.constant 1.000000e+00 : f32
    %175 = vector.broadcast %cst_33 : f32 to vector<8x32xf32>
    %176 = arith.addf %175, %174 : vector<8x32xf32>
    %177 = arith.divf %175, %176 : vector<8x32xf32>
    %178 = vector.extract_strided_slice %160 {offsets = [0, 64], sizes = [8, 32], strides = [1, 1]} : vector<8x96xf32> to vector<8x32xf32>
    %179 = vector.extract_strided_slice %161 {offsets = [0, 64], sizes = [8, 32], strides = [1, 1]} : vector<8x96xf32> to vector<8x32xf32>
    %180 = vector.broadcast %3 : vector<1x32xf32> to vector<8x32xf32>
    %181 = arith.addf %179, %180 : vector<8x32xf32>
    %182 = arith.mulf %169, %181 : vector<8x32xf32>
    %183 = arith.addf %178, %182 : vector<8x32xf32>
    %184 = math.tanh %183 : vector<8x32xf32>
    %cst_34 = arith.constant 1.000000e+00 : f32
    %185 = vector.broadcast %cst_34 : f32 to vector<8x32xf32>
    %186 = arith.subf %185, %177 : vector<8x32xf32>
    %187 = arith.mulf %186, %184 : vector<8x32xf32>
    %188 = arith.mulf %177, %159 : vector<8x32xf32>
    %189 = arith.addf %187, %188 : vector<8x32xf32>
    %190 = vector.extract_strided_slice %8 {offsets = [48, 0], sizes = [8, 96], strides = [1, 1]} : vector<64x96xf32> to vector<8x96xf32>
    %cst_35 = arith.constant dense<0.000000e+00> : vector<8x96xf32>
    %191 = tpu.matmul %189, %2, %cst_35 {dimension_numbers = #tpu.dot_dimension_numbers<[1], [0], [0], [1], [0, 0, 1, 1], [], []>} : vector<8x32xf32>, vector<32x96xf32>, vector<8x96xf32> -> vector<8x96xf32>
    %192 = vector.extract_strided_slice %190 {offsets = [0, 0], sizes = [8, 32], strides = [1, 1]} : vector<8x96xf32> to vector<8x32xf32>
    %193 = vector.extract_strided_slice %191 {offsets = [0, 0], sizes = [8, 32], strides = [1, 1]} : vector<8x96xf32> to vector<8x32xf32>
    %194 = arith.addf %192, %193 : vector<8x32xf32>
    %195 = arith.negf %194 : vector<8x32xf32>
    %196 = math.exp %195 : vector<8x32xf32>
    %cst_36 = arith.constant 1.000000e+00 : f32
    %197 = vector.broadcast %cst_36 : f32 to vector<8x32xf32>
    %198 = arith.addf %197, %196 : vector<8x32xf32>
    %199 = arith.divf %197, %198 : vector<8x32xf32>
    %200 = vector.extract_strided_slice %190 {offsets = [0, 32], sizes = [8, 32], strides = [1, 1]} : vector<8x96xf32> to vector<8x32xf32>
    %201 = vector.extract_strided_slice %191 {offsets = [0, 32], sizes = [8, 32], strides = [1, 1]} : vector<8x96xf32> to vector<8x32xf32>
    %202 = arith.addf %200, %201 : vector<8x32xf32>
    %203 = arith.negf %202 : vector<8x32xf32>
    %204 = math.exp %203 : vector<8x32xf32>
    %cst_37 = arith.constant 1.000000e+00 : f32
    %205 = vector.broadcast %cst_37 : f32 to vector<8x32xf32>
    %206 = arith.addf %205, %204 : vector<8x32xf32>
    %207 = arith.divf %205, %206 : vector<8x32xf32>
    %208 = vector.extract_strided_slice %190 {offsets = [0, 64], sizes = [8, 32], strides = [1, 1]} : vector<8x96xf32> to vector<8x32xf32>
    %209 = vector.extract_strided_slice %191 {offsets = [0, 64], sizes = [8, 32], strides = [1, 1]} : vector<8x96xf32> to vector<8x32xf32>
    %210 = vector.broadcast %3 : vector<1x32xf32> to vector<8x32xf32>
    %211 = arith.addf %209, %210 : vector<8x32xf32>
    %212 = arith.mulf %199, %211 : vector<8x32xf32>
    %213 = arith.addf %208, %212 : vector<8x32xf32>
    %214 = math.tanh %213 : vector<8x32xf32>
    %cst_38 = arith.constant 1.000000e+00 : f32
    %215 = vector.broadcast %cst_38 : f32 to vector<8x32xf32>
    %216 = arith.subf %215, %207 : vector<8x32xf32>
    %217 = arith.mulf %216, %214 : vector<8x32xf32>
    %218 = arith.mulf %207, %189 : vector<8x32xf32>
    %219 = arith.addf %217, %218 : vector<8x32xf32>
    %220 = vector.extract_strided_slice %8 {offsets = [56, 0], sizes = [8, 96], strides = [1, 1]} : vector<64x96xf32> to vector<8x96xf32>
    %cst_39 = arith.constant dense<0.000000e+00> : vector<8x96xf32>
    %221 = tpu.matmul %219, %2, %cst_39 {dimension_numbers = #tpu.dot_dimension_numbers<[1], [0], [0], [1], [0, 0, 1, 1], [], []>} : vector<8x32xf32>, vector<32x96xf32>, vector<8x96xf32> -> vector<8x96xf32>
    %222 = vector.extract_strided_slice %220 {offsets = [0, 0], sizes = [8, 32], strides = [1, 1]} : vector<8x96xf32> to vector<8x32xf32>
    %223 = vector.extract_strided_slice %221 {offsets = [0, 0], sizes = [8, 32], strides = [1, 1]} : vector<8x96xf32> to vector<8x32xf32>
    %224 = arith.addf %222, %223 : vector<8x32xf32>
    %225 = arith.negf %224 : vector<8x32xf32>
    %226 = math.exp %225 : vector<8x32xf32>
    %cst_40 = arith.constant 1.000000e+00 : f32
    %227 = vector.broadcast %cst_40 : f32 to vector<8x32xf32>
    %228 = arith.addf %227, %226 : vector<8x32xf32>
    %229 = arith.divf %227, %228 : vector<8x32xf32>
    %230 = vector.extract_strided_slice %220 {offsets = [0, 32], sizes = [8, 32], strides = [1, 1]} : vector<8x96xf32> to vector<8x32xf32>
    %231 = vector.extract_strided_slice %221 {offsets = [0, 32], sizes = [8, 32], strides = [1, 1]} : vector<8x96xf32> to vector<8x32xf32>
    %232 = arith.addf %230, %231 : vector<8x32xf32>
    %233 = arith.negf %232 : vector<8x32xf32>
    %234 = math.exp %233 : vector<8x32xf32>
    %cst_41 = arith.constant 1.000000e+00 : f32
    %235 = vector.broadcast %cst_41 : f32 to vector<8x32xf32>
    %236 = arith.addf %235, %234 : vector<8x32xf32>
    %237 = arith.divf %235, %236 : vector<8x32xf32>
    %238 = vector.extract_strided_slice %220 {offsets = [0, 64], sizes = [8, 32], strides = [1, 1]} : vector<8x96xf32> to vector<8x32xf32>
    %239 = vector.extract_strided_slice %221 {offsets = [0, 64], sizes = [8, 32], strides = [1, 1]} : vector<8x96xf32> to vector<8x32xf32>
    %240 = vector.broadcast %3 : vector<1x32xf32> to vector<8x32xf32>
    %241 = arith.addf %239, %240 : vector<8x32xf32>
    %242 = arith.mulf %229, %241 : vector<8x32xf32>
    %243 = arith.addf %238, %242 : vector<8x32xf32>
    %244 = math.tanh %243 : vector<8x32xf32>
    %cst_42 = arith.constant 1.000000e+00 : f32
    %245 = vector.broadcast %cst_42 : f32 to vector<8x32xf32>
    %246 = arith.subf %245, %237 : vector<8x32xf32>
    %247 = arith.mulf %246, %244 : vector<8x32xf32>
    %248 = arith.mulf %237, %219 : vector<8x32xf32>
    %249 = arith.addf %247, %248 : vector<8x32xf32>
    %250 = tpu.concatenate %39, %69, %99, %129, %159, %189, %219, %249 in 0 : vector<8x32xf32>, vector<8x32xf32>, vector<8x32xf32>, vector<8x32xf32>, vector<8x32xf32>, vector<8x32xf32>, vector<8x32xf32>, vector<8x32xf32> -> vector<64x32xf32>
    %c0_43 = arith.constant 0 : index
    %c0_44 = arith.constant 0 : index
    %251 = vector.load %arg7[%c0_43, %c0_44] : memref<32x96xf32, #tpu.memory_space<vmem>>, vector<32x96xf32>
    %c0_45 = arith.constant 0 : index
    %c0_46 = arith.constant 0 : index
    %252 = vector.load %arg9[%c0_45, %c0_46] : memref<1x32xf32, #tpu.memory_space<vmem>>, vector<1x32xf32>
    %c0_47 = arith.constant 0 : index
    %c0_48 = arith.constant 0 : index
    %253 = vector.load %arg6[%c0_47, %c0_48] : memref<32x96xf32, #tpu.memory_space<vmem>>, vector<32x96xf32>
    %cst_49 = arith.constant dense<0.000000e+00> : vector<64x96xf32>
    %254 = tpu.matmul %250, %253, %cst_49 {dimension_numbers = #tpu.dot_dimension_numbers<[1], [0], [0], [1], [0, 0, 1, 1], [], []>} : vector<64x32xf32>, vector<32x96xf32>, vector<64x96xf32> -> vector<64x96xf32>
    %c0_50 = arith.constant 0 : index
    %c0_51 = arith.constant 0 : index
    %255 = vector.load %arg8[%c0_50, %c0_51] : memref<1x96xf32, #tpu.memory_space<vmem>>, vector<1x96xf32>
    %256 = vector.broadcast %255 : vector<1x96xf32> to vector<64x96xf32>
    %257 = arith.addf %254, %256 : vector<64x96xf32>
    %cst_52 = arith.constant 0.000000e+00 : f32
    %258 = vector.broadcast %cst_52 : f32 to vector<8x32xf32>
    %259 = vector.extract_strided_slice %257 {offsets = [0, 0], sizes = [8, 96], strides = [1, 1]} : vector<64x96xf32> to vector<8x96xf32>
    %cst_53 = arith.constant dense<0.000000e+00> : vector<8x96xf32>
    %260 = tpu.matmul %258, %251, %cst_53 {dimension_numbers = #tpu.dot_dimension_numbers<[1], [0], [0], [1], [0, 0, 1, 1], [], []>} : vector<8x32xf32>, vector<32x96xf32>, vector<8x96xf32> -> vector<8x96xf32>
    %261 = vector.extract_strided_slice %259 {offsets = [0, 0], sizes = [8, 32], strides = [1, 1]} : vector<8x96xf32> to vector<8x32xf32>
    %262 = vector.extract_strided_slice %260 {offsets = [0, 0], sizes = [8, 32], strides = [1, 1]} : vector<8x96xf32> to vector<8x32xf32>
    %263 = arith.addf %261, %262 : vector<8x32xf32>
    %264 = arith.negf %263 : vector<8x32xf32>
    %265 = math.exp %264 : vector<8x32xf32>
    %cst_54 = arith.constant 1.000000e+00 : f32
    %266 = vector.broadcast %cst_54 : f32 to vector<8x32xf32>
    %267 = arith.addf %266, %265 : vector<8x32xf32>
    %268 = arith.divf %266, %267 : vector<8x32xf32>
    %269 = vector.extract_strided_slice %259 {offsets = [0, 32], sizes = [8, 32], strides = [1, 1]} : vector<8x96xf32> to vector<8x32xf32>
    %270 = vector.extract_strided_slice %260 {offsets = [0, 32], sizes = [8, 32], strides = [1, 1]} : vector<8x96xf32> to vector<8x32xf32>
    %271 = arith.addf %269, %270 : vector<8x32xf32>
    %272 = arith.negf %271 : vector<8x32xf32>
    %273 = math.exp %272 : vector<8x32xf32>
    %cst_55 = arith.constant 1.000000e+00 : f32
    %274 = vector.broadcast %cst_55 : f32 to vector<8x32xf32>
    %275 = arith.addf %274, %273 : vector<8x32xf32>
    %276 = arith.divf %274, %275 : vector<8x32xf32>
    %277 = vector.extract_strided_slice %259 {offsets = [0, 64], sizes = [8, 32], strides = [1, 1]} : vector<8x96xf32> to vector<8x32xf32>
    %278 = vector.extract_strided_slice %260 {offsets = [0, 64], sizes = [8, 32], strides = [1, 1]} : vector<8x96xf32> to vector<8x32xf32>
    %279 = vector.broadcast %252 : vector<1x32xf32> to vector<8x32xf32>
    %280 = arith.addf %278, %279 : vector<8x32xf32>
    %281 = arith.mulf %268, %280 : vector<8x32xf32>
    %282 = arith.addf %277, %281 : vector<8x32xf32>
    %283 = math.tanh %282 : vector<8x32xf32>
    %cst_56 = arith.constant 1.000000e+00 : f32
    %284 = vector.broadcast %cst_56 : f32 to vector<8x32xf32>
    %285 = arith.subf %284, %276 : vector<8x32xf32>
    %286 = arith.mulf %285, %283 : vector<8x32xf32>
    %287 = arith.mulf %276, %258 : vector<8x32xf32>
    %288 = arith.addf %286, %287 : vector<8x32xf32>
    %289 = vector.extract_strided_slice %257 {offsets = [8, 0], sizes = [8, 96], strides = [1, 1]} : vector<64x96xf32> to vector<8x96xf32>
    %cst_57 = arith.constant dense<0.000000e+00> : vector<8x96xf32>
    %290 = tpu.matmul %288, %251, %cst_57 {dimension_numbers = #tpu.dot_dimension_numbers<[1], [0], [0], [1], [0, 0, 1, 1], [], []>} : vector<8x32xf32>, vector<32x96xf32>, vector<8x96xf32> -> vector<8x96xf32>
    %291 = vector.extract_strided_slice %289 {offsets = [0, 0], sizes = [8, 32], strides = [1, 1]} : vector<8x96xf32> to vector<8x32xf32>
    %292 = vector.extract_strided_slice %290 {offsets = [0, 0], sizes = [8, 32], strides = [1, 1]} : vector<8x96xf32> to vector<8x32xf32>
    %293 = arith.addf %291, %292 : vector<8x32xf32>
    %294 = arith.negf %293 : vector<8x32xf32>
    %295 = math.exp %294 : vector<8x32xf32>
    %cst_58 = arith.constant 1.000000e+00 : f32
    %296 = vector.broadcast %cst_58 : f32 to vector<8x32xf32>
    %297 = arith.addf %296, %295 : vector<8x32xf32>
    %298 = arith.divf %296, %297 : vector<8x32xf32>
    %299 = vector.extract_strided_slice %289 {offsets = [0, 32], sizes = [8, 32], strides = [1, 1]} : vector<8x96xf32> to vector<8x32xf32>
    %300 = vector.extract_strided_slice %290 {offsets = [0, 32], sizes = [8, 32], strides = [1, 1]} : vector<8x96xf32> to vector<8x32xf32>
    %301 = arith.addf %299, %300 : vector<8x32xf32>
    %302 = arith.negf %301 : vector<8x32xf32>
    %303 = math.exp %302 : vector<8x32xf32>
    %cst_59 = arith.constant 1.000000e+00 : f32
    %304 = vector.broadcast %cst_59 : f32 to vector<8x32xf32>
    %305 = arith.addf %304, %303 : vector<8x32xf32>
    %306 = arith.divf %304, %305 : vector<8x32xf32>
    %307 = vector.extract_strided_slice %289 {offsets = [0, 64], sizes = [8, 32], strides = [1, 1]} : vector<8x96xf32> to vector<8x32xf32>
    %308 = vector.extract_strided_slice %290 {offsets = [0, 64], sizes = [8, 32], strides = [1, 1]} : vector<8x96xf32> to vector<8x32xf32>
    %309 = vector.broadcast %252 : vector<1x32xf32> to vector<8x32xf32>
    %310 = arith.addf %308, %309 : vector<8x32xf32>
    %311 = arith.mulf %298, %310 : vector<8x32xf32>
    %312 = arith.addf %307, %311 : vector<8x32xf32>
    %313 = math.tanh %312 : vector<8x32xf32>
    %cst_60 = arith.constant 1.000000e+00 : f32
    %314 = vector.broadcast %cst_60 : f32 to vector<8x32xf32>
    %315 = arith.subf %314, %306 : vector<8x32xf32>
    %316 = arith.mulf %315, %313 : vector<8x32xf32>
    %317 = arith.mulf %306, %288 : vector<8x32xf32>
    %318 = arith.addf %316, %317 : vector<8x32xf32>
    %319 = vector.extract_strided_slice %257 {offsets = [16, 0], sizes = [8, 96], strides = [1, 1]} : vector<64x96xf32> to vector<8x96xf32>
    %cst_61 = arith.constant dense<0.000000e+00> : vector<8x96xf32>
    %320 = tpu.matmul %318, %251, %cst_61 {dimension_numbers = #tpu.dot_dimension_numbers<[1], [0], [0], [1], [0, 0, 1, 1], [], []>} : vector<8x32xf32>, vector<32x96xf32>, vector<8x96xf32> -> vector<8x96xf32>
    %321 = vector.extract_strided_slice %319 {offsets = [0, 0], sizes = [8, 32], strides = [1, 1]} : vector<8x96xf32> to vector<8x32xf32>
    %322 = vector.extract_strided_slice %320 {offsets = [0, 0], sizes = [8, 32], strides = [1, 1]} : vector<8x96xf32> to vector<8x32xf32>
    %323 = arith.addf %321, %322 : vector<8x32xf32>
    %324 = arith.negf %323 : vector<8x32xf32>
    %325 = math.exp %324 : vector<8x32xf32>
    %cst_62 = arith.constant 1.000000e+00 : f32
    %326 = vector.broadcast %cst_62 : f32 to vector<8x32xf32>
    %327 = arith.addf %326, %325 : vector<8x32xf32>
    %328 = arith.divf %326, %327 : vector<8x32xf32>
    %329 = vector.extract_strided_slice %319 {offsets = [0, 32], sizes = [8, 32], strides = [1, 1]} : vector<8x96xf32> to vector<8x32xf32>
    %330 = vector.extract_strided_slice %320 {offsets = [0, 32], sizes = [8, 32], strides = [1, 1]} : vector<8x96xf32> to vector<8x32xf32>
    %331 = arith.addf %329, %330 : vector<8x32xf32>
    %332 = arith.negf %331 : vector<8x32xf32>
    %333 = math.exp %332 : vector<8x32xf32>
    %cst_63 = arith.constant 1.000000e+00 : f32
    %334 = vector.broadcast %cst_63 : f32 to vector<8x32xf32>
    %335 = arith.addf %334, %333 : vector<8x32xf32>
    %336 = arith.divf %334, %335 : vector<8x32xf32>
    %337 = vector.extract_strided_slice %319 {offsets = [0, 64], sizes = [8, 32], strides = [1, 1]} : vector<8x96xf32> to vector<8x32xf32>
    %338 = vector.extract_strided_slice %320 {offsets = [0, 64], sizes = [8, 32], strides = [1, 1]} : vector<8x96xf32> to vector<8x32xf32>
    %339 = vector.broadcast %252 : vector<1x32xf32> to vector<8x32xf32>
    %340 = arith.addf %338, %339 : vector<8x32xf32>
    %341 = arith.mulf %328, %340 : vector<8x32xf32>
    %342 = arith.addf %337, %341 : vector<8x32xf32>
    %343 = math.tanh %342 : vector<8x32xf32>
    %cst_64 = arith.constant 1.000000e+00 : f32
    %344 = vector.broadcast %cst_64 : f32 to vector<8x32xf32>
    %345 = arith.subf %344, %336 : vector<8x32xf32>
    %346 = arith.mulf %345, %343 : vector<8x32xf32>
    %347 = arith.mulf %336, %318 : vector<8x32xf32>
    %348 = arith.addf %346, %347 : vector<8x32xf32>
    %349 = vector.extract_strided_slice %257 {offsets = [24, 0], sizes = [8, 96], strides = [1, 1]} : vector<64x96xf32> to vector<8x96xf32>
    %cst_65 = arith.constant dense<0.000000e+00> : vector<8x96xf32>
    %350 = tpu.matmul %348, %251, %cst_65 {dimension_numbers = #tpu.dot_dimension_numbers<[1], [0], [0], [1], [0, 0, 1, 1], [], []>} : vector<8x32xf32>, vector<32x96xf32>, vector<8x96xf32> -> vector<8x96xf32>
    %351 = vector.extract_strided_slice %349 {offsets = [0, 0], sizes = [8, 32], strides = [1, 1]} : vector<8x96xf32> to vector<8x32xf32>
    %352 = vector.extract_strided_slice %350 {offsets = [0, 0], sizes = [8, 32], strides = [1, 1]} : vector<8x96xf32> to vector<8x32xf32>
    %353 = arith.addf %351, %352 : vector<8x32xf32>
    %354 = arith.negf %353 : vector<8x32xf32>
    %355 = math.exp %354 : vector<8x32xf32>
    %cst_66 = arith.constant 1.000000e+00 : f32
    %356 = vector.broadcast %cst_66 : f32 to vector<8x32xf32>
    %357 = arith.addf %356, %355 : vector<8x32xf32>
    %358 = arith.divf %356, %357 : vector<8x32xf32>
    %359 = vector.extract_strided_slice %349 {offsets = [0, 32], sizes = [8, 32], strides = [1, 1]} : vector<8x96xf32> to vector<8x32xf32>
    %360 = vector.extract_strided_slice %350 {offsets = [0, 32], sizes = [8, 32], strides = [1, 1]} : vector<8x96xf32> to vector<8x32xf32>
    %361 = arith.addf %359, %360 : vector<8x32xf32>
    %362 = arith.negf %361 : vector<8x32xf32>
    %363 = math.exp %362 : vector<8x32xf32>
    %cst_67 = arith.constant 1.000000e+00 : f32
    %364 = vector.broadcast %cst_67 : f32 to vector<8x32xf32>
    %365 = arith.addf %364, %363 : vector<8x32xf32>
    %366 = arith.divf %364, %365 : vector<8x32xf32>
    %367 = vector.extract_strided_slice %349 {offsets = [0, 64], sizes = [8, 32], strides = [1, 1]} : vector<8x96xf32> to vector<8x32xf32>
    %368 = vector.extract_strided_slice %350 {offsets = [0, 64], sizes = [8, 32], strides = [1, 1]} : vector<8x96xf32> to vector<8x32xf32>
    %369 = vector.broadcast %252 : vector<1x32xf32> to vector<8x32xf32>
    %370 = arith.addf %368, %369 : vector<8x32xf32>
    %371 = arith.mulf %358, %370 : vector<8x32xf32>
    %372 = arith.addf %367, %371 : vector<8x32xf32>
    %373 = math.tanh %372 : vector<8x32xf32>
    %cst_68 = arith.constant 1.000000e+00 : f32
    %374 = vector.broadcast %cst_68 : f32 to vector<8x32xf32>
    %375 = arith.subf %374, %366 : vector<8x32xf32>
    %376 = arith.mulf %375, %373 : vector<8x32xf32>
    %377 = arith.mulf %366, %348 : vector<8x32xf32>
    %378 = arith.addf %376, %377 : vector<8x32xf32>
    %379 = vector.extract_strided_slice %257 {offsets = [32, 0], sizes = [8, 96], strides = [1, 1]} : vector<64x96xf32> to vector<8x96xf32>
    %cst_69 = arith.constant dense<0.000000e+00> : vector<8x96xf32>
    %380 = tpu.matmul %378, %251, %cst_69 {dimension_numbers = #tpu.dot_dimension_numbers<[1], [0], [0], [1], [0, 0, 1, 1], [], []>} : vector<8x32xf32>, vector<32x96xf32>, vector<8x96xf32> -> vector<8x96xf32>
    %381 = vector.extract_strided_slice %379 {offsets = [0, 0], sizes = [8, 32], strides = [1, 1]} : vector<8x96xf32> to vector<8x32xf32>
    %382 = vector.extract_strided_slice %380 {offsets = [0, 0], sizes = [8, 32], strides = [1, 1]} : vector<8x96xf32> to vector<8x32xf32>
    %383 = arith.addf %381, %382 : vector<8x32xf32>
    %384 = arith.negf %383 : vector<8x32xf32>
    %385 = math.exp %384 : vector<8x32xf32>
    %cst_70 = arith.constant 1.000000e+00 : f32
    %386 = vector.broadcast %cst_70 : f32 to vector<8x32xf32>
    %387 = arith.addf %386, %385 : vector<8x32xf32>
    %388 = arith.divf %386, %387 : vector<8x32xf32>
    %389 = vector.extract_strided_slice %379 {offsets = [0, 32], sizes = [8, 32], strides = [1, 1]} : vector<8x96xf32> to vector<8x32xf32>
    %390 = vector.extract_strided_slice %380 {offsets = [0, 32], sizes = [8, 32], strides = [1, 1]} : vector<8x96xf32> to vector<8x32xf32>
    %391 = arith.addf %389, %390 : vector<8x32xf32>
    %392 = arith.negf %391 : vector<8x32xf32>
    %393 = math.exp %392 : vector<8x32xf32>
    %cst_71 = arith.constant 1.000000e+00 : f32
    %394 = vector.broadcast %cst_71 : f32 to vector<8x32xf32>
    %395 = arith.addf %394, %393 : vector<8x32xf32>
    %396 = arith.divf %394, %395 : vector<8x32xf32>
    %397 = vector.extract_strided_slice %379 {offsets = [0, 64], sizes = [8, 32], strides = [1, 1]} : vector<8x96xf32> to vector<8x32xf32>
    %398 = vector.extract_strided_slice %380 {offsets = [0, 64], sizes = [8, 32], strides = [1, 1]} : vector<8x96xf32> to vector<8x32xf32>
    %399 = vector.broadcast %252 : vector<1x32xf32> to vector<8x32xf32>
    %400 = arith.addf %398, %399 : vector<8x32xf32>
    %401 = arith.mulf %388, %400 : vector<8x32xf32>
    %402 = arith.addf %397, %401 : vector<8x32xf32>
    %403 = math.tanh %402 : vector<8x32xf32>
    %cst_72 = arith.constant 1.000000e+00 : f32
    %404 = vector.broadcast %cst_72 : f32 to vector<8x32xf32>
    %405 = arith.subf %404, %396 : vector<8x32xf32>
    %406 = arith.mulf %405, %403 : vector<8x32xf32>
    %407 = arith.mulf %396, %378 : vector<8x32xf32>
    %408 = arith.addf %406, %407 : vector<8x32xf32>
    %409 = vector.extract_strided_slice %257 {offsets = [40, 0], sizes = [8, 96], strides = [1, 1]} : vector<64x96xf32> to vector<8x96xf32>
    %cst_73 = arith.constant dense<0.000000e+00> : vector<8x96xf32>
    %410 = tpu.matmul %408, %251, %cst_73 {dimension_numbers = #tpu.dot_dimension_numbers<[1], [0], [0], [1], [0, 0, 1, 1], [], []>} : vector<8x32xf32>, vector<32x96xf32>, vector<8x96xf32> -> vector<8x96xf32>
    %411 = vector.extract_strided_slice %409 {offsets = [0, 0], sizes = [8, 32], strides = [1, 1]} : vector<8x96xf32> to vector<8x32xf32>
    %412 = vector.extract_strided_slice %410 {offsets = [0, 0], sizes = [8, 32], strides = [1, 1]} : vector<8x96xf32> to vector<8x32xf32>
    %413 = arith.addf %411, %412 : vector<8x32xf32>
    %414 = arith.negf %413 : vector<8x32xf32>
    %415 = math.exp %414 : vector<8x32xf32>
    %cst_74 = arith.constant 1.000000e+00 : f32
    %416 = vector.broadcast %cst_74 : f32 to vector<8x32xf32>
    %417 = arith.addf %416, %415 : vector<8x32xf32>
    %418 = arith.divf %416, %417 : vector<8x32xf32>
    %419 = vector.extract_strided_slice %409 {offsets = [0, 32], sizes = [8, 32], strides = [1, 1]} : vector<8x96xf32> to vector<8x32xf32>
    %420 = vector.extract_strided_slice %410 {offsets = [0, 32], sizes = [8, 32], strides = [1, 1]} : vector<8x96xf32> to vector<8x32xf32>
    %421 = arith.addf %419, %420 : vector<8x32xf32>
    %422 = arith.negf %421 : vector<8x32xf32>
    %423 = math.exp %422 : vector<8x32xf32>
    %cst_75 = arith.constant 1.000000e+00 : f32
    %424 = vector.broadcast %cst_75 : f32 to vector<8x32xf32>
    %425 = arith.addf %424, %423 : vector<8x32xf32>
    %426 = arith.divf %424, %425 : vector<8x32xf32>
    %427 = vector.extract_strided_slice %409 {offsets = [0, 64], sizes = [8, 32], strides = [1, 1]} : vector<8x96xf32> to vector<8x32xf32>
    %428 = vector.extract_strided_slice %410 {offsets = [0, 64], sizes = [8, 32], strides = [1, 1]} : vector<8x96xf32> to vector<8x32xf32>
    %429 = vector.broadcast %252 : vector<1x32xf32> to vector<8x32xf32>
    %430 = arith.addf %428, %429 : vector<8x32xf32>
    %431 = arith.mulf %418, %430 : vector<8x32xf32>
    %432 = arith.addf %427, %431 : vector<8x32xf32>
    %433 = math.tanh %432 : vector<8x32xf32>
    %cst_76 = arith.constant 1.000000e+00 : f32
    %434 = vector.broadcast %cst_76 : f32 to vector<8x32xf32>
    %435 = arith.subf %434, %426 : vector<8x32xf32>
    %436 = arith.mulf %435, %433 : vector<8x32xf32>
    %437 = arith.mulf %426, %408 : vector<8x32xf32>
    %438 = arith.addf %436, %437 : vector<8x32xf32>
    %439 = vector.extract_strided_slice %257 {offsets = [48, 0], sizes = [8, 96], strides = [1, 1]} : vector<64x96xf32> to vector<8x96xf32>
    %cst_77 = arith.constant dense<0.000000e+00> : vector<8x96xf32>
    %440 = tpu.matmul %438, %251, %cst_77 {dimension_numbers = #tpu.dot_dimension_numbers<[1], [0], [0], [1], [0, 0, 1, 1], [], []>} : vector<8x32xf32>, vector<32x96xf32>, vector<8x96xf32> -> vector<8x96xf32>
    %441 = vector.extract_strided_slice %439 {offsets = [0, 0], sizes = [8, 32], strides = [1, 1]} : vector<8x96xf32> to vector<8x32xf32>
    %442 = vector.extract_strided_slice %440 {offsets = [0, 0], sizes = [8, 32], strides = [1, 1]} : vector<8x96xf32> to vector<8x32xf32>
    %443 = arith.addf %441, %442 : vector<8x32xf32>
    %444 = arith.negf %443 : vector<8x32xf32>
    %445 = math.exp %444 : vector<8x32xf32>
    %cst_78 = arith.constant 1.000000e+00 : f32
    %446 = vector.broadcast %cst_78 : f32 to vector<8x32xf32>
    %447 = arith.addf %446, %445 : vector<8x32xf32>
    %448 = arith.divf %446, %447 : vector<8x32xf32>
    %449 = vector.extract_strided_slice %439 {offsets = [0, 32], sizes = [8, 32], strides = [1, 1]} : vector<8x96xf32> to vector<8x32xf32>
    %450 = vector.extract_strided_slice %440 {offsets = [0, 32], sizes = [8, 32], strides = [1, 1]} : vector<8x96xf32> to vector<8x32xf32>
    %451 = arith.addf %449, %450 : vector<8x32xf32>
    %452 = arith.negf %451 : vector<8x32xf32>
    %453 = math.exp %452 : vector<8x32xf32>
    %cst_79 = arith.constant 1.000000e+00 : f32
    %454 = vector.broadcast %cst_79 : f32 to vector<8x32xf32>
    %455 = arith.addf %454, %453 : vector<8x32xf32>
    %456 = arith.divf %454, %455 : vector<8x32xf32>
    %457 = vector.extract_strided_slice %439 {offsets = [0, 64], sizes = [8, 32], strides = [1, 1]} : vector<8x96xf32> to vector<8x32xf32>
    %458 = vector.extract_strided_slice %440 {offsets = [0, 64], sizes = [8, 32], strides = [1, 1]} : vector<8x96xf32> to vector<8x32xf32>
    %459 = vector.broadcast %252 : vector<1x32xf32> to vector<8x32xf32>
    %460 = arith.addf %458, %459 : vector<8x32xf32>
    %461 = arith.mulf %448, %460 : vector<8x32xf32>
    %462 = arith.addf %457, %461 : vector<8x32xf32>
    %463 = math.tanh %462 : vector<8x32xf32>
    %cst_80 = arith.constant 1.000000e+00 : f32
    %464 = vector.broadcast %cst_80 : f32 to vector<8x32xf32>
    %465 = arith.subf %464, %456 : vector<8x32xf32>
    %466 = arith.mulf %465, %463 : vector<8x32xf32>
    %467 = arith.mulf %456, %438 : vector<8x32xf32>
    %468 = arith.addf %466, %467 : vector<8x32xf32>
    %469 = vector.extract_strided_slice %257 {offsets = [56, 0], sizes = [8, 96], strides = [1, 1]} : vector<64x96xf32> to vector<8x96xf32>
    %cst_81 = arith.constant dense<0.000000e+00> : vector<8x96xf32>
    %470 = tpu.matmul %468, %251, %cst_81 {dimension_numbers = #tpu.dot_dimension_numbers<[1], [0], [0], [1], [0, 0, 1, 1], [], []>} : vector<8x32xf32>, vector<32x96xf32>, vector<8x96xf32> -> vector<8x96xf32>
    %471 = vector.extract_strided_slice %469 {offsets = [0, 0], sizes = [8, 32], strides = [1, 1]} : vector<8x96xf32> to vector<8x32xf32>
    %472 = vector.extract_strided_slice %470 {offsets = [0, 0], sizes = [8, 32], strides = [1, 1]} : vector<8x96xf32> to vector<8x32xf32>
    %473 = arith.addf %471, %472 : vector<8x32xf32>
    %474 = arith.negf %473 : vector<8x32xf32>
    %475 = math.exp %474 : vector<8x32xf32>
    %cst_82 = arith.constant 1.000000e+00 : f32
    %476 = vector.broadcast %cst_82 : f32 to vector<8x32xf32>
    %477 = arith.addf %476, %475 : vector<8x32xf32>
    %478 = arith.divf %476, %477 : vector<8x32xf32>
    %479 = vector.extract_strided_slice %469 {offsets = [0, 32], sizes = [8, 32], strides = [1, 1]} : vector<8x96xf32> to vector<8x32xf32>
    %480 = vector.extract_strided_slice %470 {offsets = [0, 32], sizes = [8, 32], strides = [1, 1]} : vector<8x96xf32> to vector<8x32xf32>
    %481 = arith.addf %479, %480 : vector<8x32xf32>
    %482 = arith.negf %481 : vector<8x32xf32>
    %483 = math.exp %482 : vector<8x32xf32>
    %cst_83 = arith.constant 1.000000e+00 : f32
    %484 = vector.broadcast %cst_83 : f32 to vector<8x32xf32>
    %485 = arith.addf %484, %483 : vector<8x32xf32>
    %486 = arith.divf %484, %485 : vector<8x32xf32>
    %487 = vector.extract_strided_slice %469 {offsets = [0, 64], sizes = [8, 32], strides = [1, 1]} : vector<8x96xf32> to vector<8x32xf32>
    %488 = vector.extract_strided_slice %470 {offsets = [0, 64], sizes = [8, 32], strides = [1, 1]} : vector<8x96xf32> to vector<8x32xf32>
    %489 = vector.broadcast %252 : vector<1x32xf32> to vector<8x32xf32>
    %490 = arith.addf %488, %489 : vector<8x32xf32>
    %491 = arith.mulf %478, %490 : vector<8x32xf32>
    %492 = arith.addf %487, %491 : vector<8x32xf32>
    %493 = math.tanh %492 : vector<8x32xf32>
    %cst_84 = arith.constant 1.000000e+00 : f32
    %494 = vector.broadcast %cst_84 : f32 to vector<8x32xf32>
    %495 = arith.subf %494, %486 : vector<8x32xf32>
    %496 = arith.mulf %495, %493 : vector<8x32xf32>
    %497 = arith.mulf %486, %468 : vector<8x32xf32>
    %498 = arith.addf %496, %497 : vector<8x32xf32>
    %499 = tpu.concatenate %288, %318, %348, %378, %408, %438, %468, %498 in 0 : vector<8x32xf32>, vector<8x32xf32>, vector<8x32xf32>, vector<8x32xf32>, vector<8x32xf32>, vector<8x32xf32>, vector<8x32xf32>, vector<8x32xf32> -> vector<64x32xf32>
    %c0_85 = arith.constant 0 : index
    %c0_86 = arith.constant 0 : index
    %500 = vector.load %arg10[%c0_85, %c0_86] : memref<32x32xf32, #tpu.memory_space<vmem>>, vector<32x32xf32>
    %cst_87 = arith.constant dense<0.000000e+00> : vector<64x32xf32>
    %501 = tpu.matmul %499, %500, %cst_87 {dimension_numbers = #tpu.dot_dimension_numbers<[1], [0], [0], [1], [0, 0, 1, 1], [], []>} : vector<64x32xf32>, vector<32x32xf32>, vector<64x32xf32> -> vector<64x32xf32>
    %c0_88 = arith.constant 0 : index
    %c0_89 = arith.constant 0 : index
    %502 = vector.load %arg11[%c0_88, %c0_89] : memref<1x32xf32, #tpu.memory_space<vmem>>, vector<1x32xf32>
    %503 = vector.broadcast %502 : vector<1x32xf32> to vector<64x32xf32>
    %504 = arith.addf %501, %503 : vector<64x32xf32>
    %505 = arith.negf %504 : vector<64x32xf32>
    %506 = math.exp %505 : vector<64x32xf32>
    %cst_90 = arith.constant 1.000000e+00 : f32
    %507 = vector.broadcast %cst_90 : f32 to vector<64x32xf32>
    %508 = arith.addf %507, %506 : vector<64x32xf32>
    %509 = arith.divf %507, %508 : vector<64x32xf32>
    %510 = vector.extract_strided_slice %509 {offsets = [0, 0], sizes = [8, 32], strides = [1, 1]} : vector<64x32xf32> to vector<8x32xf32>
    %511 = vector.extract_strided_slice %509 {offsets = [8, 0], sizes = [8, 32], strides = [1, 1]} : vector<64x32xf32> to vector<8x32xf32>
    %512 = vector.extract_strided_slice %509 {offsets = [16, 0], sizes = [8, 32], strides = [1, 1]} : vector<64x32xf32> to vector<8x32xf32>
    %513 = vector.extract_strided_slice %509 {offsets = [24, 0], sizes = [8, 32], strides = [1, 1]} : vector<64x32xf32> to vector<8x32xf32>
    %514 = vector.extract_strided_slice %509 {offsets = [32, 0], sizes = [8, 32], strides = [1, 1]} : vector<64x32xf32> to vector<8x32xf32>
    %515 = vector.extract_strided_slice %509 {offsets = [40, 0], sizes = [8, 32], strides = [1, 1]} : vector<64x32xf32> to vector<8x32xf32>
    %516 = vector.extract_strided_slice %509 {offsets = [48, 0], sizes = [8, 32], strides = [1, 1]} : vector<64x32xf32> to vector<8x32xf32>
    %517 = vector.extract_strided_slice %509 {offsets = [56, 0], sizes = [8, 32], strides = [1, 1]} : vector<64x32xf32> to vector<8x32xf32>
    %518 = tpu.concatenate %510, %511, %512, %513, %514, %515, %516, %517 in 1 : vector<8x32xf32>, vector<8x32xf32>, vector<8x32xf32>, vector<8x32xf32>, vector<8x32xf32>, vector<8x32xf32>, vector<8x32xf32>, vector<8x32xf32> -> vector<8x256xf32>
    %c0_91 = arith.constant 0 : index
    %c0_92 = arith.constant 0 : index
    %519 = vector.load %arg12[%c0_91, %c0_92] : memref<8x256xf32, #tpu.memory_space<vmem>>, vector<8x256xf32>
    tpu.vector_store %arg12[%c0_91, %c0_92], %518 {strides = array<i32>} : memref<8x256xf32, #tpu.memory_space<vmem>>, vector<8x256xf32>,
    return
  }
  func.func @transform_0(%arg0: i32) -> (i32, i32, i32) {
    %c0_i32 = arith.constant 0 : i32
    %c0_i32_0 = arith.constant 0 : i32
    %c0_i32_1 = arith.constant 0 : i32
    return %c0_i32, %arg0, %c0_i32_0 : i32, i32, i32
  }
  func.func @transform_1(%arg0: i32) -> (i32, i32) {
    %c0_i32 = arith.constant 0 : i32
    %c0_i32_0 = arith.constant 0 : i32
    %c0_i32_1 = arith.constant 0 : i32
    return %c0_i32, %c0_i32_0 : i32, i32
  }
  func.func @transform_2(%arg0: i32) -> (i32, i32) {
    %c0_i32 = arith.constant 0 : i32
    %c0_i32_0 = arith.constant 0 : i32
    %c0_i32_1 = arith.constant 0 : i32
    return %c0_i32, %c0_i32_0 : i32, i32
  }
  func.func @transform_3(%arg0: i32) -> (i32, i32) {
    %c0_i32 = arith.constant 0 : i32
    %c0_i32_0 = arith.constant 0 : i32
    %c0_i32_1 = arith.constant 0 : i32
    return %c0_i32, %c0_i32_0 : i32, i32
  }
  func.func @transform_4(%arg0: i32) -> (i32, i32) {
    %c0_i32 = arith.constant 0 : i32
    %c0_i32_0 = arith.constant 0 : i32
    %c0_i32_1 = arith.constant 0 : i32
    return %c0_i32, %c0_i32_0 : i32, i32
  }
  func.func @transform_5(%arg0: i32) -> (i32, i32) {
    %c0_i32 = arith.constant 0 : i32
    %c0_i32_0 = arith.constant 0 : i32
    %c0_i32_1 = arith.constant 0 : i32
    return %c0_i32, %c0_i32_0 : i32, i32
  }
  func.func @transform_6(%arg0: i32) -> (i32, i32) {
    %c0_i32 = arith.constant 0 : i32
    %c0_i32_0 = arith.constant 0 : i32
    %c0_i32_1 = arith.constant 0 : i32
    return %c0_i32, %c0_i32_0 : i32, i32
  }
  func.func @transform_7(%arg0: i32) -> (i32, i32) {
    %c0_i32 = arith.constant 0 : i32
    %c0_i32_0 = arith.constant 0 : i32
    %c0_i32_1 = arith.constant 0 : i32
    return %c0_i32, %c0_i32_0 : i32, i32
  }
  func.func @transform_8(%arg0: i32) -> (i32, i32) {
    %c0_i32 = arith.constant 0 : i32
    %c0_i32_0 = arith.constant 0 : i32
    %c0_i32_1 = arith.constant 0 : i32
    return %c0_i32, %c0_i32_0 : i32, i32
  }
  func.func @transform_9(%arg0: i32) -> (i32, i32) {
    %c0_i32 = arith.constant 0 : i32
    %c0_i32_0 = arith.constant 0 : i32
    %c0_i32_1 = arith.constant 0 : i32
    return %c0_i32, %c0_i32_0 : i32, i32
  }
  func.func @transform_10(%arg0: i32) -> (i32, i32) {
    %c0_i32 = arith.constant 0 : i32
    %c0_i32_0 = arith.constant 0 : i32
    %c0_i32_1 = arith.constant 0 : i32
    return %c0_i32, %c0_i32_0 : i32, i32
  }
  func.func @transform_11(%arg0: i32) -> (i32, i32) {
    %c0_i32 = arith.constant 0 : i32
    %c0_i32_0 = arith.constant 0 : i32
    return %arg0, %c0_i32 : i32, i32
  }
}

</mosaic_0001>

<llo_original>
// kernel: embedder_forward.1
$region0: #{embedder_forward.1}
  #allocation0 [shape = 'u32[]', space=smem, size = 0x4, offset = 0x4, fixed_abs, tag = 'smem constant byte address 0x4 - core index']
  #allocation1 [shape = 'u32[144,128]{1,0:T(1,128)}', space=vmem, size = 0x12000, scoped, tag = 'internal scratch']
  %s0 = inlined_call_operand.vmem [shape: f32[8,8,4], index: 0, kind: input, shape index: {}]
  %s1 = inlined_call_operand.vmem [shape: f32[4,96], index: 1, kind: input, shape index: {}]
  %s2 = inlined_call_operand.vmem [shape: f32[32,96], index: 2, kind: input, shape index: {}]
  %s3 = inlined_call_operand.vmem [shape: f32[1,96], index: 3, kind: input, shape index: {}]
  %s4 = inlined_call_operand.vmem [shape: f32[1,32], index: 4, kind: input, shape index: {}]
  %s5 = inlined_call_operand.vmem [shape: f32[32,96], index: 5, kind: input, shape index: {}]
  %s6 = inlined_call_operand.vmem [shape: f32[32,96], index: 6, kind: input, shape index: {}]
  %s7 = inlined_call_operand.vmem [shape: f32[1,96], index: 7, kind: input, shape index: {}]
  %s8 = inlined_call_operand.vmem [shape: f32[1,32], index: 8, kind: input, shape index: {}]
  %s9 = inlined_call_operand.vmem [shape: f32[32,32], index: 9, kind: input, shape index: {}]
  %s10 = inlined_call_operand.vmem [shape: f32[1,32], index: 10, kind: input, shape index: {}]
  %s11 = inlined_call_operand.vmem [shape: f32[8,256], index: 11, kind: output, shape index: {}]
  %s12 = sld [smem:[#allocation0]]
  $region54: #{embedder_forward.1} parent=0
    _
  %s14 = ssub.s32 1, %s12
  %s15 = scalar_select 0, %s14, %s12
  // Predicated region
  $region2: #{embedder_forward.1} parent=0 // pred_check
    _
  $region3: #{embedder_forward.1} parent=0 // pred_check_branch
    %17 = sbr.rel (0) target = $region5
  $region4: #{embedder_forward.1} parent=0 // pred_region
    _
  $region5: #{embedder_forward.1} parent=0 // pred_fallthru
    _
  // Predicated region
  $region6: #{embedder_forward.1} parent=0 // pred_check
    _
  $region7: #{embedder_forward.1} parent=0 // pred_check_branch
    %19 = sbr.rel (0) target = $region9
  $region8: #{embedder_forward.1} parent=0 // pred_region
    _
  $region9: #{embedder_forward.1} parent=0 // pred_fallthru
    _
  // Predicated region
  $region10: #{embedder_forward.1} parent=0 // pred_check
    _
  $region11: #{embedder_forward.1} parent=0 // pred_check_branch
    %21 = sbr.rel (0) target = $region13
  $region12: #{embedder_forward.1} parent=0 // pred_region
    _
  $region13: #{embedder_forward.1} parent=0 // pred_fallthru
    _
  // Predicated region
  $region14: #{embedder_forward.1} parent=0 // pred_check
    _
  $region15: #{embedder_forward.1} parent=0 // pred_check_branch
    %23 = sbr.rel (0) target = $region17
  $region16: #{embedder_forward.1} parent=0 // pred_region
    _
  $region17: #{embedder_forward.1} parent=0 // pred_fallthru
    _
  // Predicated region
  $region18: #{embedder_forward.1} parent=0 // pred_check
    _
  $region19: #{embedder_forward.1} parent=0 // pred_check_branch
    %25 = sbr.rel (0) target = $region21
  $region20: #{embedder_forward.1} parent=0 // pred_region
    _
  $region21: #{embedder_forward.1} parent=0 // pred_fallthru
    _
  // Predicated region
  $region22: #{embedder_forward.1} parent=0 // pred_check
    _
  $region23: #{embedder_forward.1} parent=0 // pred_check_branch
    %27 = sbr.rel (0) target = $region25
  $region24: #{embedder_forward.1} parent=0 // pred_region
    _
  $region25: #{embedder_forward.1} parent=0 // pred_fallthru
    _
  // Predicated region
  $region26: #{embedder_forward.1} parent=0 // pred_check
    _
  $region27: #{embedder_forward.1} parent=0 // pred_check_branch
    %29 = sbr.rel (0) target = $region29
  $region28: #{embedder_forward.1} parent=0 // pred_region
    _
  $region29: #{embedder_forward.1} parent=0 // pred_fallthru
    _
  // Predicated region
  $region30: #{embedder_forward.1} parent=0 // pred_check
    _
  $region31: #{embedder_forward.1} parent=0 // pred_check_branch
    %31 = sbr.rel (0) target = $region33
  $region32: #{embedder_forward.1} parent=0 // pred_region
    _
  $region33: #{embedder_forward.1} parent=0 // pred_fallthru
    _
  // Predicated region
  $region34: #{embedder_forward.1} parent=0 // pred_check
    _
  $region35: #{embedder_forward.1} parent=0 // pred_check_branch
    %33 = sbr.rel (0) target = $region37
  $region36: #{embedder_forward.1} parent=0 // pred_region
    _
  $region37: #{embedder_forward.1} parent=0 // pred_fallthru
    _
  // Predicated region
  $region38: #{embedder_forward.1} parent=0 // pred_check
    _
  $region39: #{embedder_forward.1} parent=0 // pred_check_branch
    %35 = sbr.rel (0) target = $region41
  $region40: #{embedder_forward.1} parent=0 // pred_region
    _
  $region41: #{embedder_forward.1} parent=0 // pred_fallthru
    _
  // Predicated region
  $region42: #{embedder_forward.1} parent=0 // pred_check
    _
  $region43: #{embedder_forward.1} parent=0 // pred_check_branch
    %37 = sbr.rel (0) target = $region45
  $region44: #{embedder_forward.1} parent=0 // pred_region
    _
  $region45: #{embedder_forward.1} parent=0 // pred_fallthru
    _
  %v38 = vld [vmem:[%s0] sm:$0xff]
  %v39 = vld [vmem:[%s0 + $0x8] sm:$0xff]
  %v40 = vld [vmem:[%s0 + $0x10] sm:$0xff]
  %v41 = vld [vmem:[%s0 + $0x18] sm:$0xff]
  %v42 = vld [vmem:[%s0 + $0x20] sm:$0xff]
  %v43 = vld [vmem:[%s0 + $0x28] sm:$0xff]
  %v44 = vld [vmem:[%s0 + $0x30] sm:$0xff]
  %v45 = vld [vmem:[%s0 + $0x38] sm:$0xff]
  %v46 = vld [vmem:[%s2] sm:$0xff]
  %v47 = vld [vmem:[%s2 + $0x8] sm:$0xff]
  %v48 = vld [vmem:[%s2 + $0x10] sm:$0xff]
  %v49 = vld [vmem:[%s2 + $0x18] sm:$0xff]
  %v50 = vld [vmem:[%s4] sm:$0x1]
  %v51 = vld [vmem:[%s1] sm:$0xf]
  %v52 = vld [vmem:[%s3] sm:$0x1]
  %v54 = vlaneseq
  %v55 = vshrl.u32 %v54, 7
  %v56 = vsub.s32 0, %v55
  %v57 = vrot.slane %v52, %v56
  %vm59 = vcmask 31744
  %v61 = vsel %vm59, %v38, 0
  %v64 = vsel %vm59, %v39, 0
  %v67 = vsel %vm59, %v40, 0
  %v70 = vsel %vm59, %v41, 0
  %v73 = vsel %vm59, %v42, 0
  %v76 = vsel %vm59, %v43, 0
  %v79 = vsel %vm59, %v44, 0
  %v82 = vsel %vm59, %v45, 0
  %vm84 = vcmask 1043456
  %v86 = vsel %vm84, %v51, 0
  %88 = vmatprep.subr.mxu0 0.0
  %89 = vmatpush1.msra.mxu0 %v86
  %90 = vmatprep.subr.mxu0 0.0
  %91 = vmatpush1.msra.mxu0 0.0
  %92 = vmatprep.subr.mxu0 0.0
  %93 = vmatpush1.msra.mxu0 0.0
  %94 = vmatprep.subr.mxu0 0.0
  %95 = vmatpush1.msra.mxu0 0.0
  %96 = vmatprep.subr.mxu0 0.0
  %97 = vmatpush1.msra.mxu0 0.0
  %98 = vmatprep.subr.mxu0 0.0
  %99 = vmatpush1.msra.mxu0 0.0
  %100 = vmatprep.subr.mxu0 0.0
  %101 = vmatpush1.msra.mxu0 0.0
  %102 = vmatprep.subr.mxu0 0.0
  %103 = vmatpush1.msra.mxu0 0.0
  %104 = vmatprep.subr.mxu0 0.0
  %105 = vmatpush1.msra.mxu0 0.0
  %106 = vmatprep.subr.mxu0 0.0
  %107 = vmatpush1.msra.mxu0 0.0
  %108 = vmatprep.subr.mxu0 0.0
  %109 = vmatpush1.msra.mxu0 0.0
  %110 = vmatprep.subr.mxu0 0.0
  %111 = vmatpush1.msra.mxu0 0.0
  %112 = vmatprep.subr.mxu0 0.0
  %113 = vmatpush1.msra.mxu0 0.0
  %114 = vmatprep.subr.mxu0 0.0
  %115 = vmatpush1.msra.mxu0 0.0
  %116 = vmatprep.subr.mxu0 0.0
  %117 = vmatpush1.msra.mxu0 0.0
  %118 = vmatprep.subr.mxu0 0.0
  %119 = vmatpush1.msra.mxu0 0.0
  %120 = vmatprep.subr.mxu0 0.0
  %121 = vmatpush1.msra.mxu0 0.0
  %122 = vmatprep.subr.mxu0 0.0
  %123 = vmatpush1.msra.mxu0 0.0
  %124 = vmatprep.subr.mxu0 0.0
  %125 = vmatpush1.msra.mxu0 0.0
  %126 = vmatprep.subr.mxu0 0.0
  %127 = vmatpush1.msra.mxu0 0.0
  %128 = vmatprep.subr.mxu0 0.0
  %129 = vmatpush1.msra.mxu0 0.0
  %130 = vmatprep.subr.mxu0 0.0
  %131 = vmatpush1.msra.mxu0 0.0
  %132 = vmatprep.subr.mxu0 0.0
  %133 = vmatpush1.msra.mxu0 0.0
  %134 = vmatprep.subr.mxu0 0.0
  %135 = vmatpush1.msra.mxu0 0.0
  %136 = vmatprep.subr.mxu0 0.0
  %137 = vmatpush1.msra.mxu0 0.0
  %138 = vmatprep.subr.mxu0 0.0
  %139 = vmatpush1.msra.mxu0 0.0
  %140 = vmatprep.subr.mxu0 0.0
  %141 = vmatpush1.msra.mxu0 0.0
  %142 = vmatprep.subr.mxu0 0.0
  %143 = vmatpush1.msra.mxu0 0.0
  %144 = vmatprep.subr.mxu0 0.0
  %145 = vmatpush1.msra.mxu0 0.0
  %146 = vmatprep.subr.mxu0 0.0
  %147 = vmatpush1.msra.mxu0 0.0
  %148 = vmatprep.subr.mxu0 0.0
  %149 = vmatpush1.msra.mxu0 0.0
  %150 = vmatprep.subr.mxu0 0.0
  %151 = vmatpush1.msra.mxu0 0.0
  %152 = vmatprep.mubr.f32.mxu0 0.0
  %153 = vmatmul.mubr.f32.gmra.mrb[0].mxu0 %v61
  %v154 = vpop.f32.mrb[0].mxu0
  %v155 = vadd.f32 %v57, %v154
  %v156 = vpop.f32.mrb[0].mxu0
  %157 = vmatprep.mubr.f32.mxu0 0.0
  %158 = vmatmul.mubr.f32.gmra.mrb[0].mxu0 %v64
  %v159 = vpop.f32.mrb[0].mxu0
  %v160 = vadd.f32 %v57, %v159
  %v161 = vpop.f32.mrb[0].mxu0
  %162 = vmatprep.mubr.f32.mxu0 0.0
  %163 = vmatmul.mubr.f32.gmra.mrb[0].mxu0 %v67
  %v164 = vpop.f32.mrb[0].mxu0
  %v165 = vadd.f32 %v57, %v164
  %v166 = vpop.f32.mrb[0].mxu0
  %167 = vmatprep.mubr.f32.mxu0 0.0
  %168 = vmatmul.mubr.f32.gmra.mrb[0].mxu0 %v70
  %v169 = vpop.f32.mrb[0].mxu0
  %v170 = vadd.f32 %v57, %v169
  %v171 = vpop.f32.mrb[0].mxu0
  %172 = vmatprep.mubr.f32.mxu0 0.0
  %173 = vmatmul.mubr.f32.gmra.mrb[0].mxu0 %v73
  %v174 = vpop.f32.mrb[0].mxu0
  %v175 = vadd.f32 %v57, %v174
  %v176 = vpop.f32.mrb[0].mxu0
  %177 = vmatprep.mubr.f32.mxu0 0.0
  %178 = vmatmul.mubr.f32.gmra.mrb[0].mxu0 %v76
  %v179 = vpop.f32.mrb[0].mxu0
  %v180 = vadd.f32 %v57, %v179
  %v181 = vpop.f32.mrb[0].mxu0
  %182 = vmatprep.mubr.f32.mxu0 0.0
  %183 = vmatmul.mubr.f32.gmra.mrb[0].mxu0 %v79
  %v184 = vpop.f32.mrb[0].mxu0
  %v185 = vadd.f32 %v57, %v184
  %v186 = vpop.f32.mrb[0].mxu0
  %187 = vmatprep.mubr.f32.mxu0 0.0
  %188 = vmatmul.mubr.f32.gmra.mrb[0].mxu0 %v82
  %v189 = vpop.f32.mrb[0].mxu0
  %v190 = vadd.f32 %v57, %v189
  %v191 = vpop.f32.mrb[0].mxu0
  %192 = vdwg.mxu0
  %vm193 = vcmask 261120
  %v195 = vsel %vm193, 0.0, 0
  %197 = vmatprep.subr.mxu0 0.0
  %198 = vmatpush1.msra.mxu0 %v46
  %199 = vmatprep.subr.mxu0 0.0
  %200 = vmatpush1.msra.mxu0 %v47
  %201 = vmatprep.subr.mxu0 0.0
  %202 = vmatpush1.msra.mxu0 %v48
  %203 = vmatprep.subr.mxu0 0.0
  %204 = vmatpush1.msra.mxu0 %v49
  %205 = vmatprep.subr.mxu0 0.0
  %206 = vmatpush1.msra.mxu0 0.0
  %207 = vmatprep.subr.mxu0 0.0
  %208 = vmatpush1.msra.mxu0 0.0
  %209 = vmatprep.subr.mxu0 0.0
  %210 = vmatpush1.msra.mxu0 0.0
  %211 = vmatprep.subr.mxu0 0.0
  %212 = vmatpush1.msra.mxu0 0.0
  %213 = vmatprep.subr.mxu0 0.0
  %214 = vmatpush1.msra.mxu0 0.0
  %215 = vmatprep.subr.mxu0 0.0
  %216 = vmatpush1.msra.mxu0 0.0
  %217 = vmatprep.subr.mxu0 0.0
  %218 = vmatpush1.msra.mxu0 0.0
  %219 = vmatprep.subr.mxu0 0.0
  %220 = vmatpush1.msra.mxu0 0.0
  %221 = vmatprep.subr.mxu0 0.0
  %222 = vmatpush1.msra.mxu0 0.0
  %223 = vmatprep.subr.mxu0 0.0
  %224 = vmatpush1.msra.mxu0 0.0
  %225 = vmatprep.subr.mxu0 0.0
  %226 = vmatpush1.msra.mxu0 0.0
  %227 = vmatprep.subr.mxu0 0.0
  %228 = vmatpush1.msra.mxu0 0.0
  %229 = vmatprep.subr.mxu0 0.0
  %230 = vmatpush1.msra.mxu0 0.0
  %231 = vmatprep.subr.mxu0 0.0
  %232 = vmatpush1.msra.mxu0 0.0
  %233 = vmatprep.subr.mxu0 0.0
  %234 = vmatpush1.msra.mxu0 0.0
  %235 = vmatprep.subr.mxu0 0.0
  %236 = vmatpush1.msra.mxu0 0.0
  %237 = vmatprep.subr.mxu0 0.0
  %238 = vmatpush1.msra.mxu0 0.0
  %239 = vmatprep.subr.mxu0 0.0
  %240 = vmatpush1.msra.mxu0 0.0
  %241 = vmatprep.subr.mxu0 0.0
  %242 = vmatpush1.msra.mxu0 0.0
  %243 = vmatprep.subr.mxu0 0.0
  %244 = vmatpush1.msra.mxu0 0.0
  %245 = vmatprep.subr.mxu0 0.0
  %246 = vmatpush1.msra.mxu0 0.0
  %247 = vmatprep.subr.mxu0 0.0
  %248 = vmatpush1.msra.mxu0 0.0
  %249 = vmatprep.subr.mxu0 0.0
  %250 = vmatpush1.msra.mxu0 0.0
  %251 = vmatprep.subr.mxu0 0.0
  %252 = vmatpush1.msra.mxu0 0.0
  %253 = vmatprep.subr.mxu0 0.0
  %254 = vmatpush1.msra.mxu0 0.0
  %255 = vmatprep.subr.mxu0 0.0
  %256 = vmatpush1.msra.mxu0 0.0
  %257 = vmatprep.subr.mxu0 0.0
  %258 = vmatpush1.msra.mxu0 0.0
  %259 = vmatprep.subr.mxu0 0.0
  %260 = vmatpush1.msra.mxu0 0.0
  %261 = vmatprep.mubr.f32.mxu0 0.0
  %262 = vmatmul.mubr.f32.gmra.mrb[0].mxu0 %v195
  %v263 = vpop.f32.mrb[0].mxu0
  %v264 = vadd.f32 0.0, %v263
  %v265 = vpop.f32.mrb[0].mxu0
  %266 = vdwg.mxu0
  %v267 = vadd.f32 %v155, %v264
  %v268 = vxor.u32 %v267, 2147483648
  %v269 = vmul.f32 %v268, 1.442695
  %v270 = vpow.pop %v269
  %v271 = vadd.f32 %v270, 1.0
  %v272 = vrcp.pop %v271
  %v273 = vmul.f32 1.0, %v272
  %v275 = vlaneseq
  %v276 = vshrl.u32 %v275, 7
  %v277 = vsub.s32 0, %v276
  %v278 = vrot.slane %v50, %v277
  %279 = vrot.lane.b32.xlu0 %v278, 64
  %v280 = vpop.permute.xlu0 %279
  %v282 = vadd.f32 %v264, %v280
  %284 = vrot.lane.b32.xlu0 %v282, 64
  %v285 = vpop.permute.xlu0 %284
  %v287 = vmul.f32 %v273, %v285
  %289 = vrot.lane.b32.xlu0 %v287, 64
  %v290 = vpop.permute.xlu0 %289
  %v292 = vadd.f32 %v155, %v290
  %v293 = vtanh.pop %v292
  %v294 = vsub.f32 1.0, %v273
  %296 = vrot.lane.b32.xlu0 %v293, 96
  %v297 = vpop.permute.xlu0 %296
  %v299 = vmul.f32 %v294, %v297
  %v300 = vmul.f32 %v273, 0.0
  %v301 = vadd.f32 %v299, %v300
  %303 = vrot.lane.b32.xlu0 %v301, 96
  %v304 = vpop.permute.xlu0 %303
  %v305 = vsel %vm193, %v304, 0
  %307 = vmatprep.subr.mxu0 0.0
  %308 = vmatpush1.msra.mxu0 %v46
  %309 = vmatprep.subr.mxu0 0.0
  %310 = vmatpush1.msra.mxu0 %v47
  %311 = vmatprep.subr.mxu0 0.0
  %312 = vmatpush1.msra.mxu0 %v48
  %313 = vmatprep.subr.mxu0 0.0
  %314 = vmatpush1.msra.mxu0 %v49
  %315 = vmatprep.subr.mxu0 0.0
  %316 = vmatpush1.msra.mxu0 0.0
  %317 = vmatprep.subr.mxu0 0.0
  %318 = vmatpush1.msra.mxu0 0.0
  %319 = vmatprep.subr.mxu0 0.0
  %320 = vmatpush1.msra.mxu0 0.0
  %321 = vmatprep.subr.mxu0 0.0
  %322 = vmatpush1.msra.mxu0 0.0
  %323 = vmatprep.subr.mxu0 0.0
  %324 = vmatpush1.msra.mxu0 0.0
  %325 = vmatprep.subr.mxu0 0.0
  %326 = vmatpush1.msra.mxu0 0.0
  %327 = vmatprep.subr.mxu0 0.0
  %328 = vmatpush1.msra.mxu0 0.0
  %329 = vmatprep.subr.mxu0 0.0
  %330 = vmatpush1.msra.mxu0 0.0
  %331 = vmatprep.subr.mxu0 0.0
  %332 = vmatpush1.msra.mxu0 0.0
  %333 = vmatprep.subr.mxu0 0.0
  %334 = vmatpush1.msra.mxu0 0.0
  %335 = vmatprep.subr.mxu0 0.0
  %336 = vmatpush1.msra.mxu0 0.0
  %337 = vmatprep.subr.mxu0 0.0
  %338 = vmatpush1.msra.mxu0 0.0
  %339 = vmatprep.subr.mxu0 0.0
  %340 = vmatpush1.msra.mxu0 0.0
  %341 = vmatprep.subr.mxu0 0.0
  %342 = vmatpush1.msra.mxu0 0.0
  %343 = vmatprep.subr.mxu0 0.0
  %344 = vmatpush1.msra.mxu0 0.0
  %345 = vmatprep.subr.mxu0 0.0
  %346 = vmatpush1.msra.mxu0 0.0
  %347 = vmatprep.subr.mxu0 0.0
  %348 = vmatpush1.msra.mxu0 0.0
  %349 = vmatprep.subr.mxu0 0.0
  %350 = vmatpush1.msra.mxu0 0.0
  %351 = vmatprep.subr.mxu0 0.0
  %352 = vmatpush1.msra.mxu0 0.0
  %353 = vmatprep.subr.mxu0 0.0
  %354 = vmatpush1.msra.mxu0 0.0
  %355 = vmatprep.subr.mxu0 0.0
  %356 = vmatpush1.msra.mxu0 0.0
  %357 = vmatprep.subr.mxu0 0.0
  %358 = vmatpush1.msra.mxu0 0.0
  %359 = vmatprep.subr.mxu0 0.0
  %360 = vmatpush1.msra.mxu0 0.0
  %361 = vmatprep.subr.mxu0 0.0
  %362 = vmatpush1.msra.mxu0 0.0
  %363 = vmatprep.subr.mxu0 0.0
  %364 = vmatpush1.msra.mxu0 0.0
  %365 = vmatprep.subr.mxu0 0.0
  %366 = vmatpush1.msra.mxu0 0.0
  %367 = vmatprep.subr.mxu0 0.0
  %368 = vmatpush1.msra.mxu0 0.0
  %369 = vmatprep.subr.mxu0 0.0
  %370 = vmatpush1.msra.mxu0 0.0
  %371 = vmatprep.mubr.f32.mxu0 0.0
  %372 = vmatmul.mubr.f32.gmra.mrb[0].mxu0 %v305
  %v373 = vpop.f32.mrb[0].mxu0
  %v374 = vadd.f32 0.0, %v373
  %v375 = vpop.f32.mrb[0].mxu0
  %376 = vdwg.mxu0
  %v377 = vadd.f32 %v160, %v374
  %v378 = vxor.u32 %v377, 2147483648
  %v379 = vmul.f32 %v378, 1.442695
  %v380 = vpow.pop %v379
  %v381 = vadd.f32 %v380, 1.0
  %v382 = vrcp.pop %v381
  %v383 = vmul.f32 1.0, %v382
  %v384 = vadd.f32 %v374, %v280
  %386 = vrot.lane.b32.xlu0 %v384, 64
  %v387 = vpop.permute.xlu0 %386
  %v389 = vmul.f32 %v383, %v387
  %391 = vrot.lane.b32.xlu0 %v389, 64
  %v392 = vpop.permute.xlu0 %391
  %v394 = vadd.f32 %v160, %v392
  %v395 = vtanh.pop %v394
  %v396 = vsub.f32 1.0, %v383
  %398 = vrot.lane.b32.xlu0 %v395, 96
  %v399 = vpop.permute.xlu0 %398
  %v401 = vmul.f32 %v396, %v399
  %v402 = vmul.f32 %v383, %v301
  %v403 = vadd.f32 %v401, %v402
  %405 = vrot.lane.b32.xlu0 %v403, 96
  %v406 = vpop.permute.xlu0 %405
  %v407 = vsel %vm193, %v406, 0
  %409 = vmatprep.subr.mxu0 0.0
  %410 = vmatpush1.msra.mxu0 %v46
  %411 = vmatprep.subr.mxu0 0.0
  %412 = vmatpush1.msra.mxu0 %v47
  %413 = vmatprep.subr.mxu0 0.0
  %414 = vmatpush1.msra.mxu0 %v48
  %415 = vmatprep.subr.mxu0 0.0
  %416 = vmatpush1.msra.mxu0 %v49
  %417 = vmatprep.subr.mxu0 0.0
  %418 = vmatpush1.msra.mxu0 0.0
  %419 = vmatprep.subr.mxu0 0.0
  %420 = vmatpush1.msra.mxu0 0.0
  %421 = vmatprep.subr.mxu0 0.0
  %422 = vmatpush1.msra.mxu0 0.0
  %423 = vmatprep.subr.mxu0 0.0
  %424 = vmatpush1.msra.mxu0 0.0
  %425 = vmatprep.subr.mxu0 0.0
  %426 = vmatpush1.msra.mxu0 0.0
  %427 = vmatprep.subr.mxu0 0.0
  %428 = vmatpush1.msra.mxu0 0.0
  %429 = vmatprep.subr.mxu0 0.0
  %430 = vmatpush1.msra.mxu0 0.0
  %431 = vmatprep.subr.mxu0 0.0
  %432 = vmatpush1.msra.mxu0 0.0
  %433 = vmatprep.subr.mxu0 0.0
  %434 = vmatpush1.msra.mxu0 0.0
  %435 = vmatprep.subr.mxu0 0.0
  %436 = vmatpush1.msra.mxu0 0.0
  %437 = vmatprep.subr.mxu0 0.0
  %438 = vmatpush1.msra.mxu0 0.0
  %439 = vmatprep.subr.mxu0 0.0
  %440 = vmatpush1.msra.mxu0 0.0
  %441 = vmatprep.subr.mxu0 0.0
  %442 = vmatpush1.msra.mxu0 0.0
  %443 = vmatprep.subr.mxu0 0.0
  %444 = vmatpush1.msra.mxu0 0.0
  %445 = vmatprep.subr.mxu0 0.0
  %446 = vmatpush1.msra.mxu0 0.0
  %447 = vmatprep.subr.mxu0 0.0
  %448 = vmatpush1.msra.mxu0 0.0
  %449 = vmatprep.subr.mxu0 0.0
  %450 = vmatpush1.msra.mxu0 0.0
  %451 = vmatprep.subr.mxu0 0.0
  %452 = vmatpush1.msra.mxu0 0.0
  %453 = vmatprep.subr.mxu0 0.0
  %454 = vmatpush1.msra.mxu0 0.0
  %455 = vmatprep.subr.mxu0 0.0
  %456 = vmatpush1.msra.mxu0 0.0
  %457 = vmatprep.subr.mxu0 0.0
  %458 = vmatpush1.msra.mxu0 0.0
  %459 = vmatprep.subr.mxu0 0.0
  %460 = vmatpush1.msra.mxu0 0.0
  %461 = vmatprep.subr.mxu0 0.0
  %462 = vmatpush1.msra.mxu0 0.0
  %463 = vmatprep.subr.mxu0 0.0
  %464 = vmatpush1.msra.mxu0 0.0
  %465 = vmatprep.subr.mxu0 0.0
  %466 = vmatpush1.msra.mxu0 0.0
  %467 = vmatprep.subr.mxu0 0.0
  %468 = vmatpush1.msra.mxu0 0.0
  %469 = vmatprep.subr.mxu0 0.0
  %470 = vmatpush1.msra.mxu0 0.0
  %471 = vmatprep.subr.mxu0 0.0
  %472 = vmatpush1.msra.mxu0 0.0
  %473 = vmatprep.mubr.f32.mxu0 0.0
  %474 = vmatmul.mubr.f32.gmra.mrb[0].mxu0 %v407
  %v475 = vpop.f32.mrb[0].mxu0
  %v476 = vadd.f32 0.0, %v475
  %v477 = vpop.f32.mrb[0].mxu0
  %478 = vdwg.mxu0
  %v479 = vadd.f32 %v165, %v476
  %v480 = vxor.u32 %v479, 2147483648
  %v481 = vmul.f32 %v480, 1.442695
  %v482 = vpow.pop %v481
  %v483 = vadd.f32 %v482, 1.0
  %v484 = vrcp.pop %v483
  %v485 = vmul.f32 1.0, %v484
  %v486 = vadd.f32 %v476, %v280
  %488 = vrot.lane.b32.xlu0 %v486, 64
  %v489 = vpop.permute.xlu0 %488
  %v491 = vmul.f32 %v485, %v489
  %493 = vrot.lane.b32.xlu0 %v491, 64
  %v494 = vpop.permute.xlu0 %493
  %v496 = vadd.f32 %v165, %v494
  %v497 = vtanh.pop %v496
  %v498 = vsub.f32 1.0, %v485
  %500 = vrot.lane.b32.xlu0 %v497, 96
  %v501 = vpop.permute.xlu0 %500
  %v503 = vmul.f32 %v498, %v501
  %v504 = vmul.f32 %v485, %v403
  %v505 = vadd.f32 %v503, %v504
  %507 = vrot.lane.b32.xlu0 %v505, 96
  %v508 = vpop.permute.xlu0 %507
  %v509 = vsel %vm193, %v508, 0
  %511 = vmatprep.subr.mxu0 0.0
  %512 = vmatpush1.msra.mxu0 %v46
  %513 = vmatprep.subr.mxu0 0.0
  %514 = vmatpush1.msra.mxu0 %v47
  %515 = vmatprep.subr.mxu0 0.0
  %516 = vmatpush1.msra.mxu0 %v48
  %517 = vmatprep.subr.mxu0 0.0
  %518 = vmatpush1.msra.mxu0 %v49
  %519 = vmatprep.subr.mxu0 0.0
  %520 = vmatpush1.msra.mxu0 0.0
  %521 = vmatprep.subr.mxu0 0.0
  %522 = vmatpush1.msra.mxu0 0.0
  %523 = vmatprep.subr.mxu0 0.0
  %524 = vmatpush1.msra.mxu0 0.0
  %525 = vmatprep.subr.mxu0 0.0
  %526 = vmatpush1.msra.mxu0 0.0
  %527 = vmatprep.subr.mxu0 0.0
  %528 = vmatpush1.msra.mxu0 0.0
  %529 = vmatprep.subr.mxu0 0.0
  %530 = vmatpush1.msra.mxu0 0.0
  %531 = vmatprep.subr.mxu0 0.0
  %532 = vmatpush1.msra.mxu0 0.0
  %533 = vmatprep.subr.mxu0 0.0
  %534 = vmatpush1.msra.mxu0 0.0
  %535 = vmatprep.subr.mxu0 0.0
  %536 = vmatpush1.msra.mxu0 0.0
  %537 = vmatprep.subr.mxu0 0.0
  %538 = vmatpush1.msra.mxu0 0.0
  %539 = vmatprep.subr.mxu0 0.0
  %540 = vmatpush1.msra.mxu0 0.0
  %541 = vmatprep.subr.mxu0 0.0
  %542 = vmatpush1.msra.mxu0 0.0
  %543 = vmatprep.subr.mxu0 0.0
  %544 = vmatpush1.msra.mxu0 0.0
  %545 = vmatprep.subr.mxu0 0.0
  %546 = vmatpush1.msra.mxu0 0.0
  %547 = vmatprep.subr.mxu0 0.0
  %548 = vmatpush1.msra.mxu0 0.0
  %549 = vmatprep.subr.mxu0 0.0
  %550 = vmatpush1.msra.mxu0 0.0
  %551 = vmatprep.subr.mxu0 0.0
  %552 = vmatpush1.msra.mxu0 0.0
  %553 = vmatprep.subr.mxu0 0.0
  %554 = vmatpush1.msra.mxu0 0.0
  %555 = vmatprep.subr.mxu0 0.0
  %556 = vmatpush1.msra.mxu0 0.0
  %557 = vmatprep.subr.mxu0 0.0
  %558 = vmatpush1.msra.mxu0 0.0
  %559 = vmatprep.subr.mxu0 0.0
  %560 = vmatpush1.msra.mxu0 0.0
  %561 = vmatprep.subr.mxu0 0.0
  %562 = vmatpush1.msra.mxu0 0.0
  %563 = vmatprep.subr.mxu0 0.0
  %564 = vmatpush1.msra.mxu0 0.0
  %565 = vmatprep.subr.mxu0 0.0
  %566 = vmatpush1.msra.mxu0 0.0
  %567 = vmatprep.subr.mxu0 0.0
  %568 = vmatpush1.msra.mxu0 0.0
  %569 = vmatprep.subr.mxu0 0.0
  %570 = vmatpush1.msra.mxu0 0.0
  %571 = vmatprep.subr.mxu0 0.0
  %572 = vmatpush1.msra.mxu0 0.0
  %573 = vmatprep.subr.mxu0 0.0
  %574 = vmatpush1.msra.mxu0 0.0
  %575 = vmatprep.mubr.f32.mxu0 0.0
  %576 = vmatmul.mubr.f32.gmra.mrb[0].mxu0 %v509
  %v577 = vpop.f32.mrb[0].mxu0
  %v578 = vadd.f32 0.0, %v577
  %v579 = vpop.f32.mrb[0].mxu0
  %580 = vdwg.mxu0
  %v581 = vadd.f32 %v170, %v578
  %v582 = vxor.u32 %v581, 2147483648
  %v583 = vmul.f32 %v582, 1.442695
  %v584 = vpow.pop %v583
  %v585 = vadd.f32 %v584, 1.0
  %v586 = vrcp.pop %v585
  %v587 = vmul.f32 1.0, %v586
  %v588 = vadd.f32 %v578, %v280
  %590 = vrot.lane.b32.xlu0 %v588, 64
  %v591 = vpop.permute.xlu0 %590
  %v593 = vmul.f32 %v587, %v591
  %595 = vrot.lane.b32.xlu0 %v593, 64
  %v596 = vpop.permute.xlu0 %595
  %v598 = vadd.f32 %v170, %v596
  %v599 = vtanh.pop %v598
  %v600 = vsub.f32 1.0, %v587
  %602 = vrot.lane.b32.xlu0 %v599, 96
  %v603 = vpop.permute.xlu0 %602
  %v605 = vmul.f32 %v600, %v603
  %v606 = vmul.f32 %v587, %v505
  %v607 = vadd.f32 %v605, %v606
  %609 = vrot.lane.b32.xlu0 %v607, 96
  %v610 = vpop.permute.xlu0 %609
  %v611 = vsel %vm193, %v610, 0
  %613 = vmatprep.subr.mxu0 0.0
  %614 = vmatpush1.msra.mxu0 %v46
  %615 = vmatprep.subr.mxu0 0.0
  %616 = vmatpush1.msra.mxu0 %v47
  %617 = vmatprep.subr.mxu0 0.0
  %618 = vmatpush1.msra.mxu0 %v48
  %619 = vmatprep.subr.mxu0 0.0
  %620 = vmatpush1.msra.mxu0 %v49
  %621 = vmatprep.subr.mxu0 0.0
  %622 = vmatpush1.msra.mxu0 0.0
  %623 = vmatprep.subr.mxu0 0.0
  %624 = vmatpush1.msra.mxu0 0.0
  %625 = vmatprep.subr.mxu0 0.0
  %626 = vmatpush1.msra.mxu0 0.0
  %627 = vmatprep.subr.mxu0 0.0
  %628 = vmatpush1.msra.mxu0 0.0
  %629 = vmatprep.subr.mxu0 0.0
  %630 = vmatpush1.msra.mxu0 0.0
  %631 = vmatprep.subr.mxu0 0.0
  %632 = vmatpush1.msra.mxu0 0.0
  %633 = vmatprep.subr.mxu0 0.0
  %634 = vmatpush1.msra.mxu0 0.0
  %635 = vmatprep.subr.mxu0 0.0
  %636 = vmatpush1.msra.mxu0 0.0
  %637 = vmatprep.subr.mxu0 0.0
  %638 = vmatpush1.msra.mxu0 0.0
  %639 = vmatprep.subr.mxu0 0.0
  %640 = vmatpush1.msra.mxu0 0.0
  %641 = vmatprep.subr.mxu0 0.0
  %642 = vmatpush1.msra.mxu0 0.0
  %643 = vmatprep.subr.mxu0 0.0
  %644 = vmatpush1.msra.mxu0 0.0
  %645 = vmatprep.subr.mxu0 0.0
  %646 = vmatpush1.msra.mxu0 0.0
  %647 = vmatprep.subr.mxu0 0.0
  %648 = vmatpush1.msra.mxu0 0.0
  %649 = vmatprep.subr.mxu0 0.0
  %650 = vmatpush1.msra.mxu0 0.0
  %651 = vmatprep.subr.mxu0 0.0
  %652 = vmatpush1.msra.mxu0 0.0
  %653 = vmatprep.subr.mxu0 0.0
  %654 = vmatpush1.msra.mxu0 0.0
  %655 = vmatprep.subr.mxu0 0.0
  %656 = vmatpush1.msra.mxu0 0.0
  %657 = vmatprep.subr.mxu0 0.0
  %658 = vmatpush1.msra.mxu0 0.0
  %659 = vmatprep.subr.mxu0 0.0
  %660 = vmatpush1.msra.mxu0 0.0
  %661 = vmatprep.subr.mxu0 0.0
  %662 = vmatpush1.msra.mxu0 0.0
  %663 = vmatprep.subr.mxu0 0.0
  %664 = vmatpush1.msra.mxu0 0.0
  %665 = vmatprep.subr.mxu0 0.0
  %666 = vmatpush1.msra.mxu0 0.0
  %667 = vmatprep.subr.mxu0 0.0
  %668 = vmatpush1.msra.mxu0 0.0
  %669 = vmatprep.subr.mxu0 0.0
  %670 = vmatpush1.msra.mxu0 0.0
  %671 = vmatprep.subr.mxu0 0.0
  %672 = vmatpush1.msra.mxu0 0.0
  %673 = vmatprep.subr.mxu0 0.0
  %674 = vmatpush1.msra.mxu0 0.0
  %675 = vmatprep.subr.mxu0 0.0
  %676 = vmatpush1.msra.mxu0 0.0
  %677 = vmatprep.mubr.f32.mxu0 0.0
  %678 = vmatmul.mubr.f32.gmra.mrb[0].mxu0 %v611
  %v679 = vpop.f32.mrb[0].mxu0
  %v680 = vadd.f32 0.0, %v679
  %v681 = vpop.f32.mrb[0].mxu0
  %682 = vdwg.mxu0
  %v683 = vadd.f32 %v175, %v680
  %v684 = vxor.u32 %v683, 2147483648
  %v685 = vmul.f32 %v684, 1.442695
  %v686 = vpow.pop %v685
  %v687 = vadd.f32 %v686, 1.0
  %v688 = vrcp.pop %v687
  %v689 = vmul.f32 1.0, %v688
  %v690 = vadd.f32 %v680, %v280
  %692 = vrot.lane.b32.xlu0 %v690, 64
  %v693 = vpop.permute.xlu0 %692
  %v695 = vmul.f32 %v689, %v693
  %697 = vrot.lane.b32.xlu0 %v695, 64
  %v698 = vpop.permute.xlu0 %697
  %v700 = vadd.f32 %v175, %v698
  %v701 = vtanh.pop %v700
  %v702 = vsub.f32 1.0, %v689
  %704 = vrot.lane.b32.xlu0 %v701, 96
  %v705 = vpop.permute.xlu0 %704
  %v707 = vmul.f32 %v702, %v705
  %v708 = vmul.f32 %v689, %v607
  %v709 = vadd.f32 %v707, %v708
  %711 = vrot.lane.b32.xlu0 %v709, 96
  %v712 = vpop.permute.xlu0 %711
  %v713 = vsel %vm193, %v712, 0
  %715 = vmatprep.subr.mxu0 0.0
  %716 = vmatpush1.msra.mxu0 %v46
  %717 = vmatprep.subr.mxu0 0.0
  %718 = vmatpush1.msra.mxu0 %v47
  %719 = vmatprep.subr.mxu0 0.0
  %720 = vmatpush1.msra.mxu0 %v48
  %721 = vmatprep.subr.mxu0 0.0
  %722 = vmatpush1.msra.mxu0 %v49
  %723 = vmatprep.subr.mxu0 0.0
  %724 = vmatpush1.msra.mxu0 0.0
  %725 = vmatprep.subr.mxu0 0.0
  %726 = vmatpush1.msra.mxu0 0.0
  %727 = vmatprep.subr.mxu0 0.0
  %728 = vmatpush1.msra.mxu0 0.0
  %729 = vmatprep.subr.mxu0 0.0
  %730 = vmatpush1.msra.mxu0 0.0
  %731 = vmatprep.subr.mxu0 0.0
  %732 = vmatpush1.msra.mxu0 0.0
  %733 = vmatprep.subr.mxu0 0.0
  %734 = vmatpush1.msra.mxu0 0.0
  %735 = vmatprep.subr.mxu0 0.0
  %736 = vmatpush1.msra.mxu0 0.0
  %737 = vmatprep.subr.mxu0 0.0
  %738 = vmatpush1.msra.mxu0 0.0
  %739 = vmatprep.subr.mxu0 0.0
  %740 = vmatpush1.msra.mxu0 0.0
  %741 = vmatprep.subr.mxu0 0.0
  %742 = vmatpush1.msra.mxu0 0.0
  %743 = vmatprep.subr.mxu0 0.0
  %744 = vmatpush1.msra.mxu0 0.0
  %745 = vmatprep.subr.mxu0 0.0
  %746 = vmatpush1.msra.mxu0 0.0
  %747 = vmatprep.subr.mxu0 0.0
  %748 = vmatpush1.msra.mxu0 0.0
  %749 = vmatprep.subr.mxu0 0.0
  %750 = vmatpush1.msra.mxu0 0.0
  %751 = vmatprep.subr.mxu0 0.0
  %752 = vmatpush1.msra.mxu0 0.0
  %753 = vmatprep.subr.mxu0 0.0
  %754 = vmatpush1.msra.mxu0 0.0
  %755 = vmatprep.subr.mxu0 0.0
  %756 = vmatpush1.msra.mxu0 0.0
  %757 = vmatprep.subr.mxu0 0.0
  %758 = vmatpush1.msra.mxu0 0.0
  %759 = vmatprep.subr.mxu0 0.0
  %760 = vmatpush1.msra.mxu0 0.0
  %761 = vmatprep.subr.mxu0 0.0
  %762 = vmatpush1.msra.mxu0 0.0
  %763 = vmatprep.subr.mxu0 0.0
  %764 = vmatpush1.msra.mxu0 0.0
  %765 = vmatprep.subr.mxu0 0.0
  %766 = vmatpush1.msra.mxu0 0.0
  %767 = vmatprep.subr.mxu0 0.0
  %768 = vmatpush1.msra.mxu0 0.0
  %769 = vmatprep.subr.mxu0 0.0
  %770 = vmatpush1.msra.mxu0 0.0
  %771 = vmatprep.subr.mxu0 0.0
  %772 = vmatpush1.msra.mxu0 0.0
  %773 = vmatprep.subr.mxu0 0.0
  %774 = vmatpush1.msra.mxu0 0.0
  %775 = vmatprep.subr.mxu0 0.0
  %776 = vmatpush1.msra.mxu0 0.0
  %777 = vmatprep.subr.mxu0 0.0
  %778 = vmatpush1.msra.mxu0 0.0
  %779 = vmatprep.mubr.f32.mxu0 0.0
  %780 = vmatmul.mubr.f32.gmra.mrb[0].mxu0 %v713
  %v781 = vpop.f32.mrb[0].mxu0
  %v782 = vadd.f32 0.0, %v781
  %v783 = vpop.f32.mrb[0].mxu0
  %784 = vdwg.mxu0
  %v785 = vadd.f32 %v180, %v782
  %v786 = vxor.u32 %v785, 2147483648
  %v787 = vmul.f32 %v786, 1.442695
  %v788 = vpow.pop %v787
  %v789 = vadd.f32 %v788, 1.0
  %v790 = vrcp.pop %v789
  %v791 = vmul.f32 1.0, %v790
  %v792 = vadd.f32 %v782, %v280
  %794 = vrot.lane.b32.xlu0 %v792, 64
  %v795 = vpop.permute.xlu0 %794
  %v797 = vmul.f32 %v791, %v795
  %799 = vrot.lane.b32.xlu0 %v797, 64
  %v800 = vpop.permute.xlu0 %799
  %v802 = vadd.f32 %v180, %v800
  %v803 = vtanh.pop %v802
  %v804 = vsub.f32 1.0, %v791
  %806 = vrot.lane.b32.xlu0 %v803, 96
  %v807 = vpop.permute.xlu0 %806
  %v809 = vmul.f32 %v804, %v807
  %v810 = vmul.f32 %v791, %v709
  %v811 = vadd.f32 %v809, %v810
  %813 = vrot.lane.b32.xlu0 %v811, 96
  %v814 = vpop.permute.xlu0 %813
  %v815 = vsel %vm193, %v814, 0
  %817 = vmatprep.subr.mxu0 0.0
  %818 = vmatpush1.msra.mxu0 %v46
  %819 = vmatprep.subr.mxu0 0.0
  %820 = vmatpush1.msra.mxu0 %v47
  %821 = vmatprep.subr.mxu0 0.0
  %822 = vmatpush1.msra.mxu0 %v48
  %823 = vmatprep.subr.mxu0 0.0
  %824 = vmatpush1.msra.mxu0 %v49
  %825 = vmatprep.subr.mxu0 0.0
  %826 = vmatpush1.msra.mxu0 0.0
  %827 = vmatprep.subr.mxu0 0.0
  %828 = vmatpush1.msra.mxu0 0.0
  %829 = vmatprep.subr.mxu0 0.0
  %830 = vmatpush1.msra.mxu0 0.0
  %831 = vmatprep.subr.mxu0 0.0
  %832 = vmatpush1.msra.mxu0 0.0
  %833 = vmatprep.subr.mxu0 0.0
  %834 = vmatpush1.msra.mxu0 0.0
  %835 = vmatprep.subr.mxu0 0.0
  %836 = vmatpush1.msra.mxu0 0.0
  %837 = vmatprep.subr.mxu0 0.0
  %838 = vmatpush1.msra.mxu0 0.0
  %839 = vmatprep.subr.mxu0 0.0
  %840 = vmatpush1.msra.mxu0 0.0
  %841 = vmatprep.subr.mxu0 0.0
  %842 = vmatpush1.msra.mxu0 0.0
  %843 = vmatprep.subr.mxu0 0.0
  %844 = vmatpush1.msra.mxu0 0.0
  %845 = vmatprep.subr.mxu0 0.0
  %846 = vmatpush1.msra.mxu0 0.0
  %847 = vmatprep.subr.mxu0 0.0
  %848 = vmatpush1.msra.mxu0 0.0
  %849 = vmatprep.subr.mxu0 0.0
  %850 = vmatpush1.msra.mxu0 0.0
  %851 = vmatprep.subr.mxu0 0.0
  %852 = vmatpush1.msra.mxu0 0.0
  %853 = vmatprep.subr.mxu0 0.0
  %854 = vmatpush1.msra.mxu0 0.0
  %855 = vmatprep.subr.mxu0 0.0
  %856 = vmatpush1.msra.mxu0 0.0
  %857 = vmatprep.subr.mxu0 0.0
  %858 = vmatpush1.msra.mxu0 0.0
  %859 = vmatprep.subr.mxu0 0.0
  %860 = vmatpush1.msra.mxu0 0.0
  %861 = vmatprep.subr.mxu0 0.0
  %862 = vmatpush1.msra.mxu0 0.0
  %863 = vmatprep.subr.mxu0 0.0
  %864 = vmatpush1.msra.mxu0 0.0
  %865 = vmatprep.subr.mxu0 0.0
  %866 = vmatpush1.msra.mxu0 0.0
  %867 = vmatprep.subr.mxu0 0.0
  %868 = vmatpush1.msra.mxu0 0.0
  %869 = vmatprep.subr.mxu0 0.0
  %870 = vmatpush1.msra.mxu0 0.0
  %871 = vmatprep.subr.mxu0 0.0
  %872 = vmatpush1.msra.mxu0 0.0
  %873 = vmatprep.subr.mxu0 0.0
  %874 = vmatpush1.msra.mxu0 0.0
  %875 = vmatprep.subr.mxu0 0.0
  %876 = vmatpush1.msra.mxu0 0.0
  %877 = vmatprep.subr.mxu0 0.0
  %878 = vmatpush1.msra.mxu0 0.0
  %879 = vmatprep.subr.mxu0 0.0
  %880 = vmatpush1.msra.mxu0 0.0
  %881 = vmatprep.mubr.f32.mxu0 0.0
  %882 = vmatmul.mubr.f32.gmra.mrb[0].mxu0 %v815
  %v883 = vpop.f32.mrb[0].mxu0
  %v884 = vadd.f32 0.0, %v883
  %v885 = vpop.f32.mrb[0].mxu0
  %886 = vdwg.mxu0
  %v887 = vadd.f32 %v185, %v884
  %v888 = vxor.u32 %v887, 2147483648
  %v889 = vmul.f32 %v888, 1.442695
  %v890 = vpow.pop %v889
  %v891 = vadd.f32 %v890, 1.0
  %v892 = vrcp.pop %v891
  %v893 = vmul.f32 1.0, %v892
  %v894 = vadd.f32 %v884, %v280
  %896 = vrot.lane.b32.xlu0 %v894, 64
  %v897 = vpop.permute.xlu0 %896
  %v899 = vmul.f32 %v893, %v897
  %901 = vrot.lane.b32.xlu0 %v899, 64
  %v902 = vpop.permute.xlu0 %901
  %v904 = vadd.f32 %v185, %v902
  %v905 = vtanh.pop %v904
  %v906 = vsub.f32 1.0, %v893
  %908 = vrot.lane.b32.xlu0 %v905, 96
  %v909 = vpop.permute.xlu0 %908
  %v911 = vmul.f32 %v906, %v909
  %v912 = vmul.f32 %v893, %v811
  %v913 = vadd.f32 %v911, %v912
  %915 = vrot.lane.b32.xlu0 %v913, 96
  %v916 = vpop.permute.xlu0 %915
  %v917 = vsel %vm193, %v916, 0
  %919 = vmatprep.subr.mxu0 0.0
  %920 = vmatpush1.msra.mxu0 %v46
  %921 = vmatprep.subr.mxu0 0.0
  %922 = vmatpush1.msra.mxu0 %v47
  %923 = vmatprep.subr.mxu0 0.0
  %924 = vmatpush1.msra.mxu0 %v48
  %925 = vmatprep.subr.mxu0 0.0
  %926 = vmatpush1.msra.mxu0 %v49
  %927 = vmatprep.subr.mxu0 0.0
  %928 = vmatpush1.msra.mxu0 0.0
  %929 = vmatprep.subr.mxu0 0.0
  %930 = vmatpush1.msra.mxu0 0.0
  %931 = vmatprep.subr.mxu0 0.0
  %932 = vmatpush1.msra.mxu0 0.0
  %933 = vmatprep.subr.mxu0 0.0
  %934 = vmatpush1.msra.mxu0 0.0
  %935 = vmatprep.subr.mxu0 0.0
  %936 = vmatpush1.msra.mxu0 0.0
  %937 = vmatprep.subr.mxu0 0.0
  %938 = vmatpush1.msra.mxu0 0.0
  %939 = vmatprep.subr.mxu0 0.0
  %940 = vmatpush1.msra.mxu0 0.0
  %941 = vmatprep.subr.mxu0 0.0
  %942 = vmatpush1.msra.mxu0 0.0
  %943 = vmatprep.subr.mxu0 0.0
  %944 = vmatpush1.msra.mxu0 0.0
  %945 = vmatprep.subr.mxu0 0.0
  %946 = vmatpush1.msra.mxu0 0.0
  %947 = vmatprep.subr.mxu0 0.0
  %948 = vmatpush1.msra.mxu0 0.0
  %949 = vmatprep.subr.mxu0 0.0
  %950 = vmatpush1.msra.mxu0 0.0
  %951 = vmatprep.subr.mxu0 0.0
  %952 = vmatpush1.msra.mxu0 0.0
  %953 = vmatprep.subr.mxu0 0.0
  %954 = vmatpush1.msra.mxu0 0.0
  %955 = vmatprep.subr.mxu0 0.0
  %956 = vmatpush1.msra.mxu0 0.0
  %957 = vmatprep.subr.mxu0 0.0
  %958 = vmatpush1.msra.mxu0 0.0
  %959 = vmatprep.subr.mxu0 0.0
  %960 = vmatpush1.msra.mxu0 0.0
  %961 = vmatprep.subr.mxu0 0.0
  %962 = vmatpush1.msra.mxu0 0.0
  %963 = vmatprep.subr.mxu0 0.0
  %964 = vmatpush1.msra.mxu0 0.0
  %965 = vmatprep.subr.mxu0 0.0
  %966 = vmatpush1.msra.mxu0 0.0
  %967 = vmatprep.subr.mxu0 0.0
  %968 = vmatpush1.msra.mxu0 0.0
  %969 = vmatprep.subr.mxu0 0.0
  %970 = vmatpush1.msra.mxu0 0.0
  %971 = vmatprep.subr.mxu0 0.0
  %972 = vmatpush1.msra.mxu0 0.0
  %973 = vmatprep.subr.mxu0 0.0
  %974 = vmatpush1.msra.mxu0 0.0
  %975 = vmatprep.subr.mxu0 0.0
  %976 = vmatpush1.msra.mxu0 0.0
  %977 = vmatprep.subr.mxu0 0.0
  %978 = vmatpush1.msra.mxu0 0.0
  %979 = vmatprep.subr.mxu0 0.0
  %980 = vmatpush1.msra.mxu0 0.0
  %981 = vmatprep.subr.mxu0 0.0
  %982 = vmatpush1.msra.mxu0 0.0
  %983 = vmatprep.mubr.f32.mxu0 0.0
  %984 = vmatmul.mubr.f32.gmra.mrb[0].mxu0 %v917
  %v985 = vpop.f32.mrb[0].mxu0
  %v986 = vadd.f32 0.0, %v985
  %v987 = vpop.f32.mrb[0].mxu0
  %988 = vdwg.mxu0
  %v989 = vadd.f32 %v190, %v986
  %v990 = vxor.u32 %v989, 2147483648
  %v991 = vmul.f32 %v990, 1.442695
  %v992 = vpow.pop %v991
  %v993 = vadd.f32 %v992, 1.0
  %v994 = vrcp.pop %v993
  %v995 = vmul.f32 1.0, %v994
  %v996 = vadd.f32 %v986, %v280
  %998 = vrot.lane.b32.xlu0 %v996, 64
  %v999 = vpop.permute.xlu0 %998
  %v1001 = vmul.f32 %v995, %v999
  %1003 = vrot.lane.b32.xlu0 %v1001, 64
  %v1004 = vpop.permute.xlu0 %1003
  %v1006 = vadd.f32 %v190, %v1004
  %v1007 = vtanh.pop %v1006
  %v1008 = vsub.f32 1.0, %v995
  %1010 = vrot.lane.b32.xlu0 %v1007, 96
  %v1011 = vpop.permute.xlu0 %1010
  %v1013 = vmul.f32 %v1008, %v1011
  %v1014 = vmul.f32 %v995, %v913
  %v1015 = vadd.f32 %v1013, %v1014
  %v1016 = vld [vmem:[%s6] sm:$0xff]
  %v1017 = vld [vmem:[%s6 + $0x8] sm:$0xff]
  %v1018 = vld [vmem:[%s6 + $0x10] sm:$0xff]
  %v1019 = vld [vmem:[%s6 + $0x18] sm:$0xff]
  %v1020 = vld [vmem:[%s8] sm:$0x1]
  %v1021 = vld [vmem:[%s5] sm:$0xff]
  %v1022 = vld [vmem:[%s5 + $0x8] sm:$0xff]
  %v1023 = vld [vmem:[%s5 + $0x10] sm:$0xff]
  %v1024 = vld [vmem:[%s5 + $0x18] sm:$0xff]
  %v1025 = vld [vmem:[%s7] sm:$0x1]
  %v1027 = vlaneseq
  %v1028 = vshrl.u32 %v1027, 7
  %v1029 = vsub.s32 0, %v1028
  %v1030 = vrot.slane %v1025, %v1029
  %1033 = vrot.lane.b32.xlu0 %v1015, 96
  %v1034 = vpop.permute.xlu0 %1033
  %v1035 = vsel %vm193, %v1034, 0
  %1037 = vmatprep.subr.mxu0 0.0
  %1038 = vmatpush1.msra.mxu0 %v1021
  %1039 = vmatprep.subr.mxu0 0.0
  %1040 = vmatpush1.msra.mxu0 %v1022
  %1041 = vmatprep.subr.mxu0 0.0
  %1042 = vmatpush1.msra.mxu0 %v1023
  %1043 = vmatprep.subr.mxu0 0.0
  %1044 = vmatpush1.msra.mxu0 %v1024
  %1045 = vmatprep.subr.mxu0 0.0
  %1046 = vmatpush1.msra.mxu0 0.0
  %1047 = vmatprep.subr.mxu0 0.0
  %1048 = vmatpush1.msra.mxu0 0.0
  %1049 = vmatprep.subr.mxu0 0.0
  %1050 = vmatpush1.msra.mxu0 0.0
  %1051 = vmatprep.subr.mxu0 0.0
  %1052 = vmatpush1.msra.mxu0 0.0
  %1053 = vmatprep.subr.mxu0 0.0
  %1054 = vmatpush1.msra.mxu0 0.0
  %1055 = vmatprep.subr.mxu0 0.0
  %1056 = vmatpush1.msra.mxu0 0.0
  %1057 = vmatprep.subr.mxu0 0.0
  %1058 = vmatpush1.msra.mxu0 0.0
  %1059 = vmatprep.subr.mxu0 0.0
  %1060 = vmatpush1.msra.mxu0 0.0
  %1061 = vmatprep.subr.mxu0 0.0
  %1062 = vmatpush1.msra.mxu0 0.0
  %1063 = vmatprep.subr.mxu0 0.0
  %1064 = vmatpush1.msra.mxu0 0.0
  %1065 = vmatprep.subr.mxu0 0.0
  %1066 = vmatpush1.msra.mxu0 0.0
  %1067 = vmatprep.subr.mxu0 0.0
  %1068 = vmatpush1.msra.mxu0 0.0
  %1069 = vmatprep.subr.mxu0 0.0
  %1070 = vmatpush1.msra.mxu0 0.0
  %1071 = vmatprep.subr.mxu0 0.0
  %1072 = vmatpush1.msra.mxu0 0.0
  %1073 = vmatprep.subr.mxu0 0.0
  %1074 = vmatpush1.msra.mxu0 0.0
  %1075 = vmatprep.subr.mxu0 0.0
  %1076 = vmatpush1.msra.mxu0 0.0
  %1077 = vmatprep.subr.mxu0 0.0
  %1078 = vmatpush1.msra.mxu0 0.0
  %1079 = vmatprep.subr.mxu0 0.0
  %1080 = vmatpush1.msra.mxu0 0.0
  %1081 = vmatprep.subr.mxu0 0.0
  %1082 = vmatpush1.msra.mxu0 0.0
  %1083 = vmatprep.subr.mxu0 0.0
  %1084 = vmatpush1.msra.mxu0 0.0
  %1085 = vmatprep.subr.mxu0 0.0
  %1086 = vmatpush1.msra.mxu0 0.0
  %1087 = vmatprep.subr.mxu0 0.0
  %1088 = vmatpush1.msra.mxu0 0.0
  %1089 = vmatprep.subr.mxu0 0.0
  %1090 = vmatpush1.msra.mxu0 0.0
  %1091 = vmatprep.subr.mxu0 0.0
  %1092 = vmatpush1.msra.mxu0 0.0
  %1093 = vmatprep.subr.mxu0 0.0
  %1094 = vmatpush1.msra.mxu0 0.0
  %1095 = vmatprep.subr.mxu0 0.0
  %1096 = vmatpush1.msra.mxu0 0.0
  %1097 = vmatprep.subr.mxu0 0.0
  %1098 = vmatpush1.msra.mxu0 0.0
  %1099 = vmatprep.subr.mxu0 0.0
  %1100 = vmatpush1.msra.mxu0 0.0
  %1101 = vmatprep.mubr.f32.mxu0 0.0
  %1102 = vmatmul.mubr.f32.gmra.mrb[0].mxu0 %v305
  %v1103 = vpop.f32.mrb[0].mxu0
  %v1104 = vadd.f32 %v1030, %v1103
  %v1105 = vpop.f32.mrb[0].mxu0
  %1106 = vmatprep.mubr.f32.mxu0 0.0
  %1107 = vmatmul.mubr.f32.gmra.mrb[0].mxu0 %v407
  %v1108 = vpop.f32.mrb[0].mxu0
  %v1109 = vadd.f32 %v1030, %v1108
  %v1110 = vpop.f32.mrb[0].mxu0
  %1111 = vmatprep.mubr.f32.mxu0 0.0
  %1112 = vmatmul.mubr.f32.gmra.mrb[0].mxu0 %v509
  %v1113 = vpop.f32.mrb[0].mxu0
  %v1114 = vadd.f32 %v1030, %v1113
  %v1115 = vpop.f32.mrb[0].mxu0
  %1116 = vmatprep.mubr.f32.mxu0 0.0
  %1117 = vmatmul.mubr.f32.gmra.mrb[0].mxu0 %v611
  %v1118 = vpop.f32.mrb[0].mxu0
  %v1119 = vadd.f32 %v1030, %v1118
  %v1120 = vpop.f32.mrb[0].mxu0
  %1121 = vmatprep.mubr.f32.mxu0 0.0
  %1122 = vmatmul.mubr.f32.gmra.mrb[0].mxu0 %v713
  %v1123 = vpop.f32.mrb[0].mxu0
  %v1124 = vadd.f32 %v1030, %v1123
  %v1125 = vpop.f32.mrb[0].mxu0
  %1126 = vmatprep.mubr.f32.mxu0 0.0
  %1127 = vmatmul.mubr.f32.gmra.mrb[0].mxu0 %v815
  %v1128 = vpop.f32.mrb[0].mxu0
  %v1129 = vadd.f32 %v1030, %v1128
  %v1130 = vpop.f32.mrb[0].mxu0
  %1131 = vmatprep.mubr.f32.mxu0 0.0
  %1132 = vmatmul.mubr.f32.gmra.mrb[0].mxu0 %v917
  %v1133 = vpop.f32.mrb[0].mxu0
  %v1134 = vadd.f32 %v1030, %v1133
  %v1135 = vpop.f32.mrb[0].mxu0
  %1136 = vmatprep.mubr.f32.mxu0 0.0
  %1137 = vmatmul.mubr.f32.gmra.mrb[0].mxu0 %v1035
  %v1138 = vpop.f32.mrb[0].mxu0
  %v1139 = vadd.f32 %v1030, %v1138
  %v1140 = vpop.f32.mrb[0].mxu0
  %1141 = vdwg.mxu0
  %1142 = vmatprep.subr.mxu0 0.0
  %1143 = vmatpush1.msra.mxu0 %v1016
  %1144 = vmatprep.subr.mxu0 0.0
  %1145 = vmatpush1.msra.mxu0 %v1017
  %1146 = vmatprep.subr.mxu0 0.0
  %1147 = vmatpush1.msra.mxu0 %v1018
  %1148 = vmatprep.subr.mxu0 0.0
  %1149 = vmatpush1.msra.mxu0 %v1019
  %1150 = vmatprep.subr.mxu0 0.0
  %1151 = vmatpush1.msra.mxu0 0.0
  %1152 = vmatprep.subr.mxu0 0.0
  %1153 = vmatpush1.msra.mxu0 0.0
  %1154 = vmatprep.subr.mxu0 0.0
  %1155 = vmatpush1.msra.mxu0 0.0
  %1156 = vmatprep.subr.mxu0 0.0
  %1157 = vmatpush1.msra.mxu0 0.0
  %1158 = vmatprep.subr.mxu0 0.0
  %1159 = vmatpush1.msra.mxu0 0.0
  %1160 = vmatprep.subr.mxu0 0.0
  %1161 = vmatpush1.msra.mxu0 0.0
  %1162 = vmatprep.subr.mxu0 0.0
  %1163 = vmatpush1.msra.mxu0 0.0
  %1164 = vmatprep.subr.mxu0 0.0
  %1165 = vmatpush1.msra.mxu0 0.0
  %1166 = vmatprep.subr.mxu0 0.0
  %1167 = vmatpush1.msra.mxu0 0.0
  %1168 = vmatprep.subr.mxu0 0.0
  %1169 = vmatpush1.msra.mxu0 0.0
  %1170 = vmatprep.subr.mxu0 0.0
  %1171 = vmatpush1.msra.mxu0 0.0
  %1172 = vmatprep.subr.mxu0 0.0
  %1173 = vmatpush1.msra.mxu0 0.0
  %1174 = vmatprep.subr.mxu0 0.0
  %1175 = vmatpush1.msra.mxu0 0.0
  %1176 = vmatprep.subr.mxu0 0.0
  %1177 = vmatpush1.msra.mxu0 0.0
  %1178 = vmatprep.subr.mxu0 0.0
  %1179 = vmatpush1.msra.mxu0 0.0
  %1180 = vmatprep.subr.mxu0 0.0
  %1181 = vmatpush1.msra.mxu0 0.0
  %1182 = vmatprep.subr.mxu0 0.0
  %1183 = vmatpush1.msra.mxu0 0.0
  %1184 = vmatprep.subr.mxu0 0.0
  %1185 = vmatpush1.msra.mxu0 0.0
  %1186 = vmatprep.subr.mxu0 0.0
  %1187 = vmatpush1.msra.mxu0 0.0
  %1188 = vmatprep.subr.mxu0 0.0
  %1189 = vmatpush1.msra.mxu0 0.0
  %1190 = vmatprep.subr.mxu0 0.0
  %1191 = vmatpush1.msra.mxu0 0.0
  %1192 = vmatprep.subr.mxu0 0.0
  %1193 = vmatpush1.msra.mxu0 0.0
  %1194 = vmatprep.subr.mxu0 0.0
  %1195 = vmatpush1.msra.mxu0 0.0
  %1196 = vmatprep.subr.mxu0 0.0
  %1197 = vmatpush1.msra.mxu0 0.0
  %1198 = vmatprep.subr.mxu0 0.0
  %1199 = vmatpush1.msra.mxu0 0.0
  %1200 = vmatprep.subr.mxu0 0.0
  %1201 = vmatpush1.msra.mxu0 0.0
  %1202 = vmatprep.subr.mxu0 0.0
  %1203 = vmatpush1.msra.mxu0 0.0
  %1204 = vmatprep.subr.mxu0 0.0
  %1205 = vmatpush1.msra.mxu0 0.0
  %1206 = vmatprep.mubr.f32.mxu0 0.0
  %1207 = vmatmul.mubr.f32.gmra.mrb[0].mxu0 %v195
  %v1208 = vpop.f32.mrb[0].mxu0
  %v1209 = vadd.f32 0.0, %v1208
  %v1210 = vpop.f32.mrb[0].mxu0
  %1211 = vdwg.mxu0
  %v1212 = vadd.f32 %v1104, %v1209
  %v1213 = vxor.u32 %v1212, 2147483648
  %v1214 = vmul.f32 %v1213, 1.442695
  %v1215 = vpow.pop %v1214
  %v1216 = vadd.f32 %v1215, 1.0
  %v1217 = vrcp.pop %v1216
  %v1218 = vmul.f32 1.0, %v1217
  %v1220 = vlaneseq
  %v1221 = vshrl.u32 %v1220, 7
  %v1222 = vsub.s32 0, %v1221
  %v1223 = vrot.slane %v1020, %v1222
  %1224 = vrot.lane.b32.xlu0 %v1223, 64
  %v1225 = vpop.permute.xlu0 %1224
  %v1227 = vadd.f32 %v1209, %v1225
  %1229 = vrot.lane.b32.xlu0 %v1227, 64
  %v1230 = vpop.permute.xlu0 %1229
  %v1232 = vmul.f32 %v1218, %v1230
  %1234 = vrot.lane.b32.xlu0 %v1232, 64
  %v1235 = vpop.permute.xlu0 %1234
  %v1237 = vadd.f32 %v1104, %v1235
  %v1238 = vtanh.pop %v1237
  %v1239 = vsub.f32 1.0, %v1218
  %1241 = vrot.lane.b32.xlu0 %v1238, 96
  %v1242 = vpop.permute.xlu0 %1241
  %v1244 = vmul.f32 %v1239, %v1242
  %v1245 = vmul.f32 %v1218, 0.0
  %v1246 = vadd.f32 %v1244, %v1245
  %1248 = vrot.lane.b32.xlu0 %v1246, 96
  %v1249 = vpop.permute.xlu0 %1248
  %v1250 = vsel %vm193, %v1249, 0
  %1252 = vmatprep.subr.mxu0 0.0
  %1253 = vmatpush1.msra.mxu0 %v1016
  %1254 = vmatprep.subr.mxu0 0.0
  %1255 = vmatpush1.msra.mxu0 %v1017
  %1256 = vmatprep.subr.mxu0 0.0
  %1257 = vmatpush1.msra.mxu0 %v1018
  %1258 = vmatprep.subr.mxu0 0.0
  %1259 = vmatpush1.msra.mxu0 %v1019
  %1260 = vmatprep.subr.mxu0 0.0
  %1261 = vmatpush1.msra.mxu0 0.0
  %1262 = vmatprep.subr.mxu0 0.0
  %1263 = vmatpush1.msra.mxu0 0.0
  %1264 = vmatprep.subr.mxu0 0.0
  %1265 = vmatpush1.msra.mxu0 0.0
  %1266 = vmatprep.subr.mxu0 0.0
  %1267 = vmatpush1.msra.mxu0 0.0
  %1268 = vmatprep.subr.mxu0 0.0
  %1269 = vmatpush1.msra.mxu0 0.0
  %1270 = vmatprep.subr.mxu0 0.0
  %1271 = vmatpush1.msra.mxu0 0.0
  %1272 = vmatprep.subr.mxu0 0.0
  %1273 = vmatpush1.msra.mxu0 0.0
  %1274 = vmatprep.subr.mxu0 0.0
  %1275 = vmatpush1.msra.mxu0 0.0
  %1276 = vmatprep.subr.mxu0 0.0
  %1277 = vmatpush1.msra.mxu0 0.0
  %1278 = vmatprep.subr.mxu0 0.0
  %1279 = vmatpush1.msra.mxu0 0.0
  %1280 = vmatprep.subr.mxu0 0.0
  %1281 = vmatpush1.msra.mxu0 0.0
  %1282 = vmatprep.subr.mxu0 0.0
  %1283 = vmatpush1.msra.mxu0 0.0
  %1284 = vmatprep.subr.mxu0 0.0
  %1285 = vmatpush1.msra.mxu0 0.0
  %1286 = vmatprep.subr.mxu0 0.0
  %1287 = vmatpush1.msra.mxu0 0.0
  %1288 = vmatprep.subr.mxu0 0.0
  %1289 = vmatpush1.msra.mxu0 0.0
  %1290 = vmatprep.subr.mxu0 0.0
  %1291 = vmatpush1.msra.mxu0 0.0
  %1292 = vmatprep.subr.mxu0 0.0
  %1293 = vmatpush1.msra.mxu0 0.0
  %1294 = vmatprep.subr.mxu0 0.0
  %1295 = vmatpush1.msra.mxu0 0.0
  %1296 = vmatprep.subr.mxu0 0.0
  %1297 = vmatpush1.msra.mxu0 0.0
  %1298 = vmatprep.subr.mxu0 0.0
  %1299 = vmatpush1.msra.mxu0 0.0
  %1300 = vmatprep.subr.mxu0 0.0
  %1301 = vmatpush1.msra.mxu0 0.0
  %1302 = vmatprep.subr.mxu0 0.0
  %1303 = vmatpush1.msra.mxu0 0.0
  %1304 = vmatprep.subr.mxu0 0.0
  %1305 = vmatpush1.msra.mxu0 0.0
  %1306 = vmatprep.subr.mxu0 0.0
  %1307 = vmatpush1.msra.mxu0 0.0
  %1308 = vmatprep.subr.mxu0 0.0
  %1309 = vmatpush1.msra.mxu0 0.0
  %1310 = vmatprep.subr.mxu0 0.0
  %1311 = vmatpush1.msra.mxu0 0.0
  %1312 = vmatprep.subr.mxu0 0.0
  %1313 = vmatpush1.msra.mxu0 0.0
  %1314 = vmatprep.subr.mxu0 0.0
  %1315 = vmatpush1.msra.mxu0 0.0
  %1316 = vmatprep.mubr.f32.mxu0 0.0
  %1317 = vmatmul.mubr.f32.gmra.mrb[0].mxu0 %v1250
  %v1318 = vpop.f32.mrb[0].mxu0
  %v1319 = vadd.f32 0.0, %v1318
  %v1320 = vpop.f32.mrb[0].mxu0
  %1321 = vdwg.mxu0
  %v1322 = vadd.f32 %v1109, %v1319
  %v1323 = vxor.u32 %v1322, 2147483648
  %v1324 = vmul.f32 %v1323, 1.442695
  %v1325 = vpow.pop %v1324
  %v1326 = vadd.f32 %v1325, 1.0
  %v1327 = vrcp.pop %v1326
  %v1328 = vmul.f32 1.0, %v1327
  %v1329 = vadd.f32 %v1319, %v1225
  %1331 = vrot.lane.b32.xlu0 %v1329, 64
  %v1332 = vpop.permute.xlu0 %1331
  %v1334 = vmul.f32 %v1328, %v1332
  %1336 = vrot.lane.b32.xlu0 %v1334, 64
  %v1337 = vpop.permute.xlu0 %1336
  %v1339 = vadd.f32 %v1109, %v1337
  %v1340 = vtanh.pop %v1339
  %v1341 = vsub.f32 1.0, %v1328
  %1343 = vrot.lane.b32.xlu0 %v1340, 96
  %v1344 = vpop.permute.xlu0 %1343
  %v1346 = vmul.f32 %v1341, %v1344
  %v1347 = vmul.f32 %v1328, %v1246
  %v1348 = vadd.f32 %v1346, %v1347
  %1350 = vrot.lane.b32.xlu0 %v1348, 96
  %v1351 = vpop.permute.xlu0 %1350
  %v1352 = vsel %vm193, %v1351, 0
  %1354 = vmatprep.subr.mxu0 0.0
  %1355 = vmatpush1.msra.mxu0 %v1016
  %1356 = vmatprep.subr.mxu0 0.0
  %1357 = vmatpush1.msra.mxu0 %v1017
  %1358 = vmatprep.subr.mxu0 0.0
  %1359 = vmatpush1.msra.mxu0 %v1018
  %1360 = vmatprep.subr.mxu0 0.0
  %1361 = vmatpush1.msra.mxu0 %v1019
  %1362 = vmatprep.subr.mxu0 0.0
  %1363 = vmatpush1.msra.mxu0 0.0
  %1364 = vmatprep.subr.mxu0 0.0
  %1365 = vmatpush1.msra.mxu0 0.0
  %1366 = vmatprep.subr.mxu0 0.0
  %1367 = vmatpush1.msra.mxu0 0.0
  %1368 = vmatprep.subr.mxu0 0.0
  %1369 = vmatpush1.msra.mxu0 0.0
  %1370 = vmatprep.subr.mxu0 0.0
  %1371 = vmatpush1.msra.mxu0 0.0
  %1372 = vmatprep.subr.mxu0 0.0
  %1373 = vmatpush1.msra.mxu0 0.0
  %1374 = vmatprep.subr.mxu0 0.0
  %1375 = vmatpush1.msra.mxu0 0.0
  %1376 = vmatprep.subr.mxu0 0.0
  %1377 = vmatpush1.msra.mxu0 0.0
  %1378 = vmatprep.subr.mxu0 0.0
  %1379 = vmatpush1.msra.mxu0 0.0
  %1380 = vmatprep.subr.mxu0 0.0
  %1381 = vmatpush1.msra.mxu0 0.0
  %1382 = vmatprep.subr.mxu0 0.0
  %1383 = vmatpush1.msra.mxu0 0.0
  %1384 = vmatprep.subr.mxu0 0.0
  %1385 = vmatpush1.msra.mxu0 0.0
  %1386 = vmatprep.subr.mxu0 0.0
  %1387 = vmatpush1.msra.mxu0 0.0
  %1388 = vmatprep.subr.mxu0 0.0
  %1389 = vmatpush1.msra.mxu0 0.0
  %1390 = vmatprep.subr.mxu0 0.0
  %1391 = vmatpush1.msra.mxu0 0.0
  %1392 = vmatprep.subr.mxu0 0.0
  %1393 = vmatpush1.msra.mxu0 0.0
  %1394 = vmatprep.subr.mxu0 0.0
  %1395 = vmatpush1.msra.mxu0 0.0
  %1396 = vmatprep.subr.mxu0 0.0
  %1397 = vmatpush1.msra.mxu0 0.0
  %1398 = vmatprep.subr.mxu0 0.0
  %1399 = vmatpush1.msra.mxu0 0.0
  %1400 = vmatprep.subr.mxu0 0.0
  %1401 = vmatpush1.msra.mxu0 0.0
  %1402 = vmatprep.subr.mxu0 0.0
  %1403 = vmatpush1.msra.mxu0 0.0
  %1404 = vmatprep.subr.mxu0 0.0
  %1405 = vmatpush1.msra.mxu0 0.0
  %1406 = vmatprep.subr.mxu0 0.0
  %1407 = vmatpush1.msra.mxu0 0.0
  %1408 = vmatprep.subr.mxu0 0.0
  %1409 = vmatpush1.msra.mxu0 0.0
  %1410 = vmatprep.subr.mxu0 0.0
  %1411 = vmatpush1.msra.mxu0 0.0
  %1412 = vmatprep.subr.mxu0 0.0
  %1413 = vmatpush1.msra.mxu0 0.0
  %1414 = vmatprep.subr.mxu0 0.0
  %1415 = vmatpush1.msra.mxu0 0.0
  %1416 = vmatprep.subr.mxu0 0.0
  %1417 = vmatpush1.msra.mxu0 0.0
  %1418 = vmatprep.mubr.f32.mxu0 0.0
  %1419 = vmatmul.mubr.f32.gmra.mrb[0].mxu0 %v1352
  %v1420 = vpop.f32.mrb[0].mxu0
  %v1421 = vadd.f32 0.0, %v1420
  %v1422 = vpop.f32.mrb[0].mxu0
  %1423 = vdwg.mxu0
  %v1424 = vadd.f32 %v1114, %v1421
  %v1425 = vxor.u32 %v1424, 2147483648
  %v1426 = vmul.f32 %v1425, 1.442695
  %v1427 = vpow.pop %v1426
  %v1428 = vadd.f32 %v1427, 1.0
  %v1429 = vrcp.pop %v1428
  %v1430 = vmul.f32 1.0, %v1429
  %v1431 = vadd.f32 %v1421, %v1225
  %1433 = vrot.lane.b32.xlu0 %v1431, 64
  %v1434 = vpop.permute.xlu0 %1433
  %v1436 = vmul.f32 %v1430, %v1434
  %1438 = vrot.lane.b32.xlu0 %v1436, 64
  %v1439 = vpop.permute.xlu0 %1438
  %v1441 = vadd.f32 %v1114, %v1439
  %v1442 = vtanh.pop %v1441
  %v1443 = vsub.f32 1.0, %v1430
  %1445 = vrot.lane.b32.xlu0 %v1442, 96
  %v1446 = vpop.permute.xlu0 %1445
  %v1448 = vmul.f32 %v1443, %v1446
  %v1449 = vmul.f32 %v1430, %v1348
  %v1450 = vadd.f32 %v1448, %v1449
  %1452 = vrot.lane.b32.xlu0 %v1450, 96
  %v1453 = vpop.permute.xlu0 %1452
  %v1454 = vsel %vm193, %v1453, 0
  %1456 = vmatprep.subr.mxu0 0.0
  %1457 = vmatpush1.msra.mxu0 %v1016
  %1458 = vmatprep.subr.mxu0 0.0
  %1459 = vmatpush1.msra.mxu0 %v1017
  %1460 = vmatprep.subr.mxu0 0.0
  %1461 = vmatpush1.msra.mxu0 %v1018
  %1462 = vmatprep.subr.mxu0 0.0
  %1463 = vmatpush1.msra.mxu0 %v1019
  %1464 = vmatprep.subr.mxu0 0.0
  %1465 = vmatpush1.msra.mxu0 0.0
  %1466 = vmatprep.subr.mxu0 0.0
  %1467 = vmatpush1.msra.mxu0 0.0
  %1468 = vmatprep.subr.mxu0 0.0
  %1469 = vmatpush1.msra.mxu0 0.0
  %1470 = vmatprep.subr.mxu0 0.0
  %1471 = vmatpush1.msra.mxu0 0.0
  %1472 = vmatprep.subr.mxu0 0.0
  %1473 = vmatpush1.msra.mxu0 0.0
  %1474 = vmatprep.subr.mxu0 0.0
  %1475 = vmatpush1.msra.mxu0 0.0
  %1476 = vmatprep.subr.mxu0 0.0
  %1477 = vmatpush1.msra.mxu0 0.0
  %1478 = vmatprep.subr.mxu0 0.0
  %1479 = vmatpush1.msra.mxu0 0.0
  %1480 = vmatprep.subr.mxu0 0.0
  %1481 = vmatpush1.msra.mxu0 0.0
  %1482 = vmatprep.subr.mxu0 0.0
  %1483 = vmatpush1.msra.mxu0 0.0
  %1484 = vmatprep.subr.mxu0 0.0
  %1485 = vmatpush1.msra.mxu0 0.0
  %1486 = vmatprep.subr.mxu0 0.0
  %1487 = vmatpush1.msra.mxu0 0.0
  %1488 = vmatprep.subr.mxu0 0.0
  %1489 = vmatpush1.msra.mxu0 0.0
  %1490 = vmatprep.subr.mxu0 0.0
  %1491 = vmatpush1.msra.mxu0 0.0
  %1492 = vmatprep.subr.mxu0 0.0
  %1493 = vmatpush1.msra.mxu0 0.0
  %1494 = vmatprep.subr.mxu0 0.0
  %1495 = vmatpush1.msra.mxu0 0.0
  %1496 = vmatprep.subr.mxu0 0.0
  %1497 = vmatpush1.msra.mxu0 0.0
  %1498 = vmatprep.subr.mxu0 0.0
  %1499 = vmatpush1.msra.mxu0 0.0
  %1500 = vmatprep.subr.mxu0 0.0
  %1501 = vmatpush1.msra.mxu0 0.0
  %1502 = vmatprep.subr.mxu0 0.0
  %1503 = vmatpush1.msra.mxu0 0.0
  %1504 = vmatprep.subr.mxu0 0.0
  %1505 = vmatpush1.msra.mxu0 0.0
  %1506 = vmatprep.subr.mxu0 0.0
  %1507 = vmatpush1.msra.mxu0 0.0
  %1508 = vmatprep.subr.mxu0 0.0
  %1509 = vmatpush1.msra.mxu0 0.0
  %1510 = vmatprep.subr.mxu0 0.0
  %1511 = vmatpush1.msra.mxu0 0.0
  %1512 = vmatprep.subr.mxu0 0.0
  %1513 = vmatpush1.msra.mxu0 0.0
  %1514 = vmatprep.subr.mxu0 0.0
  %1515 = vmatpush1.msra.mxu0 0.0
  %1516 = vmatprep.subr.mxu0 0.0
  %1517 = vmatpush1.msra.mxu0 0.0
  %1518 = vmatprep.subr.mxu0 0.0
  %1519 = vmatpush1.msra.mxu0 0.0
  %1520 = vmatprep.mubr.f32.mxu0 0.0
  %1521 = vmatmul.mubr.f32.gmra.mrb[0].mxu0 %v1454
  %v1522 = vpop.f32.mrb[0].mxu0
  %v1523 = vadd.f32 0.0, %v1522
  %v1524 = vpop.f32.mrb[0].mxu0
  %1525 = vdwg.mxu0
  %v1526 = vadd.f32 %v1119, %v1523
  %v1527 = vxor.u32 %v1526, 2147483648
  %v1528 = vmul.f32 %v1527, 1.442695
  %v1529 = vpow.pop %v1528
  %v1530 = vadd.f32 %v1529, 1.0
  %v1531 = vrcp.pop %v1530
  %v1532 = vmul.f32 1.0, %v1531
  %v1533 = vadd.f32 %v1523, %v1225
  %1535 = vrot.lane.b32.xlu0 %v1533, 64
  %v1536 = vpop.permute.xlu0 %1535
  %v1538 = vmul.f32 %v1532, %v1536
  %1540 = vrot.lane.b32.xlu0 %v1538, 64
  %v1541 = vpop.permute.xlu0 %1540
  %v1543 = vadd.f32 %v1119, %v1541
  %v1544 = vtanh.pop %v1543
  %v1545 = vsub.f32 1.0, %v1532
  %1547 = vrot.lane.b32.xlu0 %v1544, 96
  %v1548 = vpop.permute.xlu0 %1547
  %v1550 = vmul.f32 %v1545, %v1548
  %v1551 = vmul.f32 %v1532, %v1450
  %v1552 = vadd.f32 %v1550, %v1551
  %1554 = vrot.lane.b32.xlu0 %v1552, 96
  %v1555 = vpop.permute.xlu0 %1554
  %v1556 = vsel %vm193, %v1555, 0
  %1558 = vmatprep.subr.mxu0 0.0
  %1559 = vmatpush1.msra.mxu0 %v1016
  %1560 = vmatprep.subr.mxu0 0.0
  %1561 = vmatpush1.msra.mxu0 %v1017
  %1562 = vmatprep.subr.mxu0 0.0
  %1563 = vmatpush1.msra.mxu0 %v1018
  %1564 = vmatprep.subr.mxu0 0.0
  %1565 = vmatpush1.msra.mxu0 %v1019
  %1566 = vmatprep.subr.mxu0 0.0
  %1567 = vmatpush1.msra.mxu0 0.0
  %1568 = vmatprep.subr.mxu0 0.0
  %1569 = vmatpush1.msra.mxu0 0.0
  %1570 = vmatprep.subr.mxu0 0.0
  %1571 = vmatpush1.msra.mxu0 0.0
  %1572 = vmatprep.subr.mxu0 0.0
  %1573 = vmatpush1.msra.mxu0 0.0
  %1574 = vmatprep.subr.mxu0 0.0
  %1575 = vmatpush1.msra.mxu0 0.0
  %1576 = vmatprep.subr.mxu0 0.0
  %1577 = vmatpush1.msra.mxu0 0.0
  %1578 = vmatprep.subr.mxu0 0.0
  %1579 = vmatpush1.msra.mxu0 0.0
  %1580 = vmatprep.subr.mxu0 0.0
  %1581 = vmatpush1.msra.mxu0 0.0
  %1582 = vmatprep.subr.mxu0 0.0
  %1583 = vmatpush1.msra.mxu0 0.0
  %1584 = vmatprep.subr.mxu0 0.0
  %1585 = vmatpush1.msra.mxu0 0.0
  %1586 = vmatprep.subr.mxu0 0.0
  %1587 = vmatpush1.msra.mxu0 0.0
  %1588 = vmatprep.subr.mxu0 0.0
  %1589 = vmatpush1.msra.mxu0 0.0
  %1590 = vmatprep.subr.mxu0 0.0
  %1591 = vmatpush1.msra.mxu0 0.0
  %1592 = vmatprep.subr.mxu0 0.0
  %1593 = vmatpush1.msra.mxu0 0.0
  %1594 = vmatprep.subr.mxu0 0.0
  %1595 = vmatpush1.msra.mxu0 0.0
  %1596 = vmatprep.subr.mxu0 0.0
  %1597 = vmatpush1.msra.mxu0 0.0
  %1598 = vmatprep.subr.mxu0 0.0
  %1599 = vmatpush1.msra.mxu0 0.0
  %1600 = vmatprep.subr.mxu0 0.0
  %1601 = vmatpush1.msra.mxu0 0.0
  %1602 = vmatprep.subr.mxu0 0.0
  %1603 = vmatpush1.msra.mxu0 0.0
  %1604 = vmatprep.subr.mxu0 0.0
  %1605 = vmatpush1.msra.mxu0 0.0
  %1606 = vmatprep.subr.mxu0 0.0
  %1607 = vmatpush1.msra.mxu0 0.0
  %1608 = vmatprep.subr.mxu0 0.0
  %1609 = vmatpush1.msra.mxu0 0.0
  %1610 = vmatprep.subr.mxu0 0.0
  %1611 = vmatpush1.msra.mxu0 0.0
  %1612 = vmatprep.subr.mxu0 0.0
  %1613 = vmatpush1.msra.mxu0 0.0
  %1614 = vmatprep.subr.mxu0 0.0
  %1615 = vmatpush1.msra.mxu0 0.0
  %1616 = vmatprep.subr.mxu0 0.0
  %1617 = vmatpush1.msra.mxu0 0.0
  %1618 = vmatprep.subr.mxu0 0.0
  %1619 = vmatpush1.msra.mxu0 0.0
  %1620 = vmatprep.subr.mxu0 0.0
  %1621 = vmatpush1.msra.mxu0 0.0
  %1622 = vmatprep.mubr.f32.mxu0 0.0
  %1623 = vmatmul.mubr.f32.gmra.mrb[0].mxu0 %v1556
  %v1624 = vpop.f32.mrb[0].mxu0
  %v1625 = vadd.f32 0.0, %v1624
  %v1626 = vpop.f32.mrb[0].mxu0
  %1627 = vdwg.mxu0
  %v1628 = vadd.f32 %v1124, %v1625
  %v1629 = vxor.u32 %v1628, 2147483648
  %v1630 = vmul.f32 %v1629, 1.442695
  %v1631 = vpow.pop %v1630
  %v1632 = vadd.f32 %v1631, 1.0
  %v1633 = vrcp.pop %v1632
  %v1634 = vmul.f32 1.0, %v1633
  %v1635 = vadd.f32 %v1625, %v1225
  %1637 = vrot.lane.b32.xlu0 %v1635, 64
  %v1638 = vpop.permute.xlu0 %1637
  %v1640 = vmul.f32 %v1634, %v1638
  %1642 = vrot.lane.b32.xlu0 %v1640, 64
  %v1643 = vpop.permute.xlu0 %1642
  %v1645 = vadd.f32 %v1124, %v1643
  %v1646 = vtanh.pop %v1645
  %v1647 = vsub.f32 1.0, %v1634
  %1649 = vrot.lane.b32.xlu0 %v1646, 96
  %v1650 = vpop.permute.xlu0 %1649
  %v1652 = vmul.f32 %v1647, %v1650
  %v1653 = vmul.f32 %v1634, %v1552
  %v1654 = vadd.f32 %v1652, %v1653
  %1656 = vrot.lane.b32.xlu0 %v1654, 96
  %v1657 = vpop.permute.xlu0 %1656
  %v1658 = vsel %vm193, %v1657, 0
  %1660 = vmatprep.subr.mxu0 0.0
  %1661 = vmatpush1.msra.mxu0 %v1016
  %1662 = vmatprep.subr.mxu0 0.0
  %1663 = vmatpush1.msra.mxu0 %v1017
  %1664 = vmatprep.subr.mxu0 0.0
  %1665 = vmatpush1.msra.mxu0 %v1018
  %1666 = vmatprep.subr.mxu0 0.0
  %1667 = vmatpush1.msra.mxu0 %v1019
  %1668 = vmatprep.subr.mxu0 0.0
  %1669 = vmatpush1.msra.mxu0 0.0
  %1670 = vmatprep.subr.mxu0 0.0
  %1671 = vmatpush1.msra.mxu0 0.0
  %1672 = vmatprep.subr.mxu0 0.0
  %1673 = vmatpush1.msra.mxu0 0.0
  %1674 = vmatprep.subr.mxu0 0.0
  %1675 = vmatpush1.msra.mxu0 0.0
  %1676 = vmatprep.subr.mxu0 0.0
  %1677 = vmatpush1.msra.mxu0 0.0
  %1678 = vmatprep.subr.mxu0 0.0
  %1679 = vmatpush1.msra.mxu0 0.0
  %1680 = vmatprep.subr.mxu0 0.0
  %1681 = vmatpush1.msra.mxu0 0.0
  %1682 = vmatprep.subr.mxu0 0.0
  %1683 = vmatpush1.msra.mxu0 0.0
  %1684 = vmatprep.subr.mxu0 0.0
  %1685 = vmatpush1.msra.mxu0 0.0
  %1686 = vmatprep.subr.mxu0 0.0
  %1687 = vmatpush1.msra.mxu0 0.0
  %1688 = vmatprep.subr.mxu0 0.0
  %1689 = vmatpush1.msra.mxu0 0.0
  %1690 = vmatprep.subr.mxu0 0.0
  %1691 = vmatpush1.msra.mxu0 0.0
  %1692 = vmatprep.subr.mxu0 0.0
  %1693 = vmatpush1.msra.mxu0 0.0
  %1694 = vmatprep.subr.mxu0 0.0
  %1695 = vmatpush1.msra.mxu0 0.0
  %1696 = vmatprep.subr.mxu0 0.0
  %1697 = vmatpush1.msra.mxu0 0.0
  %1698 = vmatprep.subr.mxu0 0.0
  %1699 = vmatpush1.msra.mxu0 0.0
  %1700 = vmatprep.subr.mxu0 0.0
  %1701 = vmatpush1.msra.mxu0 0.0
  %1702 = vmatprep.subr.mxu0 0.0
  %1703 = vmatpush1.msra.mxu0 0.0
  %1704 = vmatprep.subr.mxu0 0.0
  %1705 = vmatpush1.msra.mxu0 0.0
  %1706 = vmatprep.subr.mxu0 0.0
  %1707 = vmatpush1.msra.mxu0 0.0
  %1708 = vmatprep.subr.mxu0 0.0
  %1709 = vmatpush1.msra.mxu0 0.0
  %1710 = vmatprep.subr.mxu0 0.0
  %1711 = vmatpush1.msra.mxu0 0.0
  %1712 = vmatprep.subr.mxu0 0.0
  %1713 = vmatpush1.msra.mxu0 0.0
  %1714 = vmatprep.subr.mxu0 0.0
  %1715 = vmatpush1.msra.mxu0 0.0
  %1716 = vmatprep.subr.mxu0 0.0
  %1717 = vmatpush1.msra.mxu0 0.0
  %1718 = vmatprep.subr.mxu0 0.0
  %1719 = vmatpush1.msra.mxu0 0.0
  %1720 = vmatprep.subr.mxu0 0.0
  %1721 = vmatpush1.msra.mxu0 0.0
  %1722 = vmatprep.subr.mxu0 0.0
  %1723 = vmatpush1.msra.mxu0 0.0
  %1724 = vmatprep.mubr.f32.mxu0 0.0
  %1725 = vmatmul.mubr.f32.gmra.mrb[0].mxu0 %v1658
  %v1726 = vpop.f32.mrb[0].mxu0
  %v1727 = vadd.f32 0.0, %v1726
  %v1728 = vpop.f32.mrb[0].mxu0
  %1729 = vdwg.mxu0
  %v1730 = vadd.f32 %v1129, %v1727
  %v1731 = vxor.u32 %v1730, 2147483648
  %v1732 = vmul.f32 %v1731, 1.442695
  %v1733 = vpow.pop %v1732
  %v1734 = vadd.f32 %v1733, 1.0
  %v1735 = vrcp.pop %v1734
  %v1736 = vmul.f32 1.0, %v1735
  %v1737 = vadd.f32 %v1727, %v1225
  %1739 = vrot.lane.b32.xlu0 %v1737, 64
  %v1740 = vpop.permute.xlu0 %1739
  %v1742 = vmul.f32 %v1736, %v1740
  %1744 = vrot.lane.b32.xlu0 %v1742, 64
  %v1745 = vpop.permute.xlu0 %1744
  %v1747 = vadd.f32 %v1129, %v1745
  %v1748 = vtanh.pop %v1747
  %v1749 = vsub.f32 1.0, %v1736
  %1751 = vrot.lane.b32.xlu0 %v1748, 96
  %v1752 = vpop.permute.xlu0 %1751
  %v1754 = vmul.f32 %v1749, %v1752
  %v1755 = vmul.f32 %v1736, %v1654
  %v1756 = vadd.f32 %v1754, %v1755
  %1758 = vrot.lane.b32.xlu0 %v1756, 96
  %v1759 = vpop.permute.xlu0 %1758
  %v1760 = vsel %vm193, %v1759, 0
  %1762 = vmatprep.subr.mxu0 0.0
  %1763 = vmatpush1.msra.mxu0 %v1016
  %1764 = vmatprep.subr.mxu0 0.0
  %1765 = vmatpush1.msra.mxu0 %v1017
  %1766 = vmatprep.subr.mxu0 0.0
  %1767 = vmatpush1.msra.mxu0 %v1018
  %1768 = vmatprep.subr.mxu0 0.0
  %1769 = vmatpush1.msra.mxu0 %v1019
  %1770 = vmatprep.subr.mxu0 0.0
  %1771 = vmatpush1.msra.mxu0 0.0
  %1772 = vmatprep.subr.mxu0 0.0
  %1773 = vmatpush1.msra.mxu0 0.0
  %1774 = vmatprep.subr.mxu0 0.0
  %1775 = vmatpush1.msra.mxu0 0.0
  %1776 = vmatprep.subr.mxu0 0.0
  %1777 = vmatpush1.msra.mxu0 0.0
  %1778 = vmatprep.subr.mxu0 0.0
  %1779 = vmatpush1.msra.mxu0 0.0
  %1780 = vmatprep.subr.mxu0 0.0
  %1781 = vmatpush1.msra.mxu0 0.0
  %1782 = vmatprep.subr.mxu0 0.0
  %1783 = vmatpush1.msra.mxu0 0.0
  %1784 = vmatprep.subr.mxu0 0.0
  %1785 = vmatpush1.msra.mxu0 0.0
  %1786 = vmatprep.subr.mxu0 0.0
  %1787 = vmatpush1.msra.mxu0 0.0
  %1788 = vmatprep.subr.mxu0 0.0
  %1789 = vmatpush1.msra.mxu0 0.0
  %1790 = vmatprep.subr.mxu0 0.0
  %1791 = vmatpush1.msra.mxu0 0.0
  %1792 = vmatprep.subr.mxu0 0.0
  %1793 = vmatpush1.msra.mxu0 0.0
  %1794 = vmatprep.subr.mxu0 0.0
  %1795 = vmatpush1.msra.mxu0 0.0
  %1796 = vmatprep.subr.mxu0 0.0
  %1797 = vmatpush1.msra.mxu0 0.0
  %1798 = vmatprep.subr.mxu0 0.0
  %1799 = vmatpush1.msra.mxu0 0.0
  %1800 = vmatprep.subr.mxu0 0.0
  %1801 = vmatpush1.msra.mxu0 0.0
  %1802 = vmatprep.subr.mxu0 0.0
  %1803 = vmatpush1.msra.mxu0 0.0
  %1804 = vmatprep.subr.mxu0 0.0
  %1805 = vmatpush1.msra.mxu0 0.0
  %1806 = vmatprep.subr.mxu0 0.0
  %1807 = vmatpush1.msra.mxu0 0.0
  %1808 = vmatprep.subr.mxu0 0.0
  %1809 = vmatpush1.msra.mxu0 0.0
  %1810 = vmatprep.subr.mxu0 0.0
  %1811 = vmatpush1.msra.mxu0 0.0
  %1812 = vmatprep.subr.mxu0 0.0
  %1813 = vmatpush1.msra.mxu0 0.0
  %1814 = vmatprep.subr.mxu0 0.0
  %1815 = vmatpush1.msra.mxu0 0.0
  %1816 = vmatprep.subr.mxu0 0.0
  %1817 = vmatpush1.msra.mxu0 0.0
  %1818 = vmatprep.subr.mxu0 0.0
  %1819 = vmatpush1.msra.mxu0 0.0
  %1820 = vmatprep.subr.mxu0 0.0
  %1821 = vmatpush1.msra.mxu0 0.0
  %1822 = vmatprep.subr.mxu0 0.0
  %1823 = vmatpush1.msra.mxu0 0.0
  %1824 = vmatprep.subr.mxu0 0.0
  %1825 = vmatpush1.msra.mxu0 0.0
  %1826 = vmatprep.mubr.f32.mxu0 0.0
  %1827 = vmatmul.mubr.f32.gmra.mrb[0].mxu0 %v1760
  %v1828 = vpop.f32.mrb[0].mxu0
  %v1829 = vadd.f32 0.0, %v1828
  %v1830 = vpop.f32.mrb[0].mxu0
  %1831 = vdwg.mxu0
  %v1832 = vadd.f32 %v1134, %v1829
  %v1833 = vxor.u32 %v1832, 2147483648
  %v1834 = vmul.f32 %v1833, 1.442695
  %v1835 = vpow.pop %v1834
  %v1836 = vadd.f32 %v1835, 1.0
  %v1837 = vrcp.pop %v1836
  %v1838 = vmul.f32 1.0, %v1837
  %v1839 = vadd.f32 %v1829, %v1225
  %1841 = vrot.lane.b32.xlu0 %v1839, 64
  %v1842 = vpop.permute.xlu0 %1841
  %v1844 = vmul.f32 %v1838, %v1842
  %1846 = vrot.lane.b32.xlu0 %v1844, 64
  %v1847 = vpop.permute.xlu0 %1846
  %v1849 = vadd.f32 %v1134, %v1847
  %v1850 = vtanh.pop %v1849
  %v1851 = vsub.f32 1.0, %v1838
  %1853 = vrot.lane.b32.xlu0 %v1850, 96
  %v1854 = vpop.permute.xlu0 %1853
  %v1856 = vmul.f32 %v1851, %v1854
  %v1857 = vmul.f32 %v1838, %v1756
  %v1858 = vadd.f32 %v1856, %v1857
  %1860 = vrot.lane.b32.xlu0 %v1858, 96
  %v1861 = vpop.permute.xlu0 %1860
  %v1862 = vsel %vm193, %v1861, 0
  %1864 = vmatprep.subr.mxu0 0.0
  %1865 = vmatpush1.msra.mxu0 %v1016
  %1866 = vmatprep.subr.mxu0 0.0
  %1867 = vmatpush1.msra.mxu0 %v1017
  %1868 = vmatprep.subr.mxu0 0.0
  %1869 = vmatpush1.msra.mxu0 %v1018
  %1870 = vmatprep.subr.mxu0 0.0
  %1871 = vmatpush1.msra.mxu0 %v1019
  %1872 = vmatprep.subr.mxu0 0.0
  %1873 = vmatpush1.msra.mxu0 0.0
  %1874 = vmatprep.subr.mxu0 0.0
  %1875 = vmatpush1.msra.mxu0 0.0
  %1876 = vmatprep.subr.mxu0 0.0
  %1877 = vmatpush1.msra.mxu0 0.0
  %1878 = vmatprep.subr.mxu0 0.0
  %1879 = vmatpush1.msra.mxu0 0.0
  %1880 = vmatprep.subr.mxu0 0.0
  %1881 = vmatpush1.msra.mxu0 0.0
  %1882 = vmatprep.subr.mxu0 0.0
  %1883 = vmatpush1.msra.mxu0 0.0
  %1884 = vmatprep.subr.mxu0 0.0
  %1885 = vmatpush1.msra.mxu0 0.0
  %1886 = vmatprep.subr.mxu0 0.0
  %1887 = vmatpush1.msra.mxu0 0.0
  %1888 = vmatprep.subr.mxu0 0.0
  %1889 = vmatpush1.msra.mxu0 0.0
  %1890 = vmatprep.subr.mxu0 0.0
  %1891 = vmatpush1.msra.mxu0 0.0
  %1892 = vmatprep.subr.mxu0 0.0
  %1893 = vmatpush1.msra.mxu0 0.0
  %1894 = vmatprep.subr.mxu0 0.0
  %1895 = vmatpush1.msra.mxu0 0.0
  %1896 = vmatprep.subr.mxu0 0.0
  %1897 = vmatpush1.msra.mxu0 0.0
  %1898 = vmatprep.subr.mxu0 0.0
  %1899 = vmatpush1.msra.mxu0 0.0
  %1900 = vmatprep.subr.mxu0 0.0
  %1901 = vmatpush1.msra.mxu0 0.0
  %1902 = vmatprep.subr.mxu0 0.0
  %1903 = vmatpush1.msra.mxu0 0.0
  %1904 = vmatprep.subr.mxu0 0.0
  %1905 = vmatpush1.msra.mxu0 0.0
  %1906 = vmatprep.subr.mxu0 0.0
  %1907 = vmatpush1.msra.mxu0 0.0
  %1908 = vmatprep.subr.mxu0 0.0
  %1909 = vmatpush1.msra.mxu0 0.0
  %1910 = vmatprep.subr.mxu0 0.0
  %1911 = vmatpush1.msra.mxu0 0.0
  %1912 = vmatprep.subr.mxu0 0.0
  %1913 = vmatpush1.msra.mxu0 0.0
  %1914 = vmatprep.subr.mxu0 0.0
  %1915 = vmatpush1.msra.mxu0 0.0
  %1916 = vmatprep.subr.mxu0 0.0
  %1917 = vmatpush1.msra.mxu0 0.0
  %1918 = vmatprep.subr.mxu0 0.0
  %1919 = vmatpush1.msra.mxu0 0.0
  %1920 = vmatprep.subr.mxu0 0.0
  %1921 = vmatpush1.msra.mxu0 0.0
  %1922 = vmatprep.subr.mxu0 0.0
  %1923 = vmatpush1.msra.mxu0 0.0
  %1924 = vmatprep.subr.mxu0 0.0
  %1925 = vmatpush1.msra.mxu0 0.0
  %1926 = vmatprep.subr.mxu0 0.0
  %1927 = vmatpush1.msra.mxu0 0.0
  %1928 = vmatprep.mubr.f32.mxu0 0.0
  %1929 = vmatmul.mubr.f32.gmra.mrb[0].mxu0 %v1862
  %v1930 = vpop.f32.mrb[0].mxu0
  %v1931 = vadd.f32 0.0, %v1930
  %v1932 = vpop.f32.mrb[0].mxu0
  %1933 = vdwg.mxu0
  %v1934 = vadd.f32 %v1139, %v1931
  %v1935 = vxor.u32 %v1934, 2147483648
  %v1936 = vmul.f32 %v1935, 1.442695
  %v1937 = vpow.pop %v1936
  %v1938 = vadd.f32 %v1937, 1.0
  %v1939 = vrcp.pop %v1938
  %v1940 = vmul.f32 1.0, %v1939
  %v1941 = vadd.f32 %v1931, %v1225
  %1943 = vrot.lane.b32.xlu0 %v1941, 64
  %v1944 = vpop.permute.xlu0 %1943
  %v1946 = vmul.f32 %v1940, %v1944
  %1948 = vrot.lane.b32.xlu0 %v1946, 64
  %v1949 = vpop.permute.xlu0 %1948
  %v1951 = vadd.f32 %v1139, %v1949
  %v1952 = vtanh.pop %v1951
  %v1953 = vsub.f32 1.0, %v1940
  %1955 = vrot.lane.b32.xlu0 %v1952, 96
  %v1956 = vpop.permute.xlu0 %1955
  %v1958 = vmul.f32 %v1953, %v1956
  %v1959 = vmul.f32 %v1940, %v1858
  %v1960 = vadd.f32 %v1958, %v1959
  %v1961 = vld [vmem:[%s9] sm:$0xff]
  %v1962 = vld [vmem:[%s9 + $0x8] sm:$0xff]
  %v1963 = vld [vmem:[%s9 + $0x10] sm:$0xff]
  %v1964 = vld [vmem:[%s9 + $0x18] sm:$0xff]
  %v1965 = vld [vmem:[%s10] sm:$0x1]
  %v1967 = vlaneseq
  %v1968 = vshrl.u32 %v1967, 7
  %v1969 = vsub.s32 0, %v1968
  %v1970 = vrot.slane %v1965, %v1969
  %1973 = vrot.lane.b32.xlu0 %v1960, 96
  %v1974 = vpop.permute.xlu0 %1973
  %v1975 = vsel %vm193, %v1974, 0
  %1977 = vmatprep.subr.mxu0 0.0
  %1978 = vmatpush1.msra.mxu0 %v1961
  %1979 = vmatprep.subr.mxu0 0.0
  %1980 = vmatpush1.msra.mxu0 %v1962
  %1981 = vmatprep.subr.mxu0 0.0
  %1982 = vmatpush1.msra.mxu0 %v1963
  %1983 = vmatprep.subr.mxu0 0.0
  %1984 = vmatpush1.msra.mxu0 %v1964
  %1985 = vmatprep.subr.mxu0 0.0
  %1986 = vmatpush1.msra.mxu0 0.0
  %1987 = vmatprep.subr.mxu0 0.0
  %1988 = vmatpush1.msra.mxu0 0.0
  %1989 = vmatprep.subr.mxu0 0.0
  %1990 = vmatpush1.msra.mxu0 0.0
  %1991 = vmatprep.subr.mxu0 0.0
  %1992 = vmatpush1.msra.mxu0 0.0
  %1993 = vmatprep.subr.mxu0 0.0
  %1994 = vmatpush1.msra.mxu0 0.0
  %1995 = vmatprep.subr.mxu0 0.0
  %1996 = vmatpush1.msra.mxu0 0.0
  %1997 = vmatprep.subr.mxu0 0.0
  %1998 = vmatpush1.msra.mxu0 0.0
  %1999 = vmatprep.subr.mxu0 0.0
  %2000 = vmatpush1.msra.mxu0 0.0
  %2001 = vmatprep.subr.mxu0 0.0
  %2002 = vmatpush1.msra.mxu0 0.0
  %2003 = vmatprep.subr.mxu0 0.0
  %2004 = vmatpush1.msra.mxu0 0.0
  %2005 = vmatprep.subr.mxu0 0.0
  %2006 = vmatpush1.msra.mxu0 0.0
  %2007 = vmatprep.subr.mxu0 0.0
  %2008 = vmatpush1.msra.mxu0 0.0
  %2009 = vmatprep.subr.mxu0 0.0
  %2010 = vmatpush1.msra.mxu0 0.0
  %2011 = vmatprep.subr.mxu0 0.0
  %2012 = vmatpush1.msra.mxu0 0.0
  %2013 = vmatprep.subr.mxu0 0.0
  %2014 = vmatpush1.msra.mxu0 0.0
  %2015 = vmatprep.subr.mxu0 0.0
  %2016 = vmatpush1.msra.mxu0 0.0
  %2017 = vmatprep.subr.mxu0 0.0
  %2018 = vmatpush1.msra.mxu0 0.0
  %2019 = vmatprep.subr.mxu0 0.0
  %2020 = vmatpush1.msra.mxu0 0.0
  %2021 = vmatprep.subr.mxu0 0.0
  %2022 = vmatpush1.msra.mxu0 0.0
  %2023 = vmatprep.subr.mxu0 0.0
  %2024 = vmatpush1.msra.mxu0 0.0
  %2025 = vmatprep.subr.mxu0 0.0
  %2026 = vmatpush1.msra.mxu0 0.0
  %2027 = vmatprep.subr.mxu0 0.0
  %2028 = vmatpush1.msra.mxu0 0.0
  %2029 = vmatprep.subr.mxu0 0.0
  %2030 = vmatpush1.msra.mxu0 0.0
  %2031 = vmatprep.subr.mxu0 0.0
  %2032 = vmatpush1.msra.mxu0 0.0
  %2033 = vmatprep.subr.mxu0 0.0
  %2034 = vmatpush1.msra.mxu0 0.0
  %2035 = vmatprep.subr.mxu0 0.0
  %2036 = vmatpush1.msra.mxu0 0.0
  %2037 = vmatprep.subr.mxu0 0.0
  %2038 = vmatpush1.msra.mxu0 0.0
  %2039 = vmatprep.subr.mxu0 0.0
  %2040 = vmatpush1.msra.mxu0 0.0
  %2041 = vmatprep.mubr.f32.mxu0 0.0
  %2042 = vmatmul.mubr.f32.gmra.mrb[0].mxu0 %v1250
  %v2043 = vpop.f32.mrb[0].mxu0
  %v2044 = vadd.f32 %v1970, %v2043
  %v2045 = vpop.f32.mrb[0].mxu0
  %2046 = vmatprep.mubr.f32.mxu0 0.0
  %2047 = vmatmul.mubr.f32.gmra.mrb[0].mxu0 %v1352
  %v2048 = vpop.f32.mrb[0].mxu0
  %v2049 = vadd.f32 %v1970, %v2048
  %v2050 = vpop.f32.mrb[0].mxu0
  %2051 = vmatprep.mubr.f32.mxu0 0.0
  %2052 = vmatmul.mubr.f32.gmra.mrb[0].mxu0 %v1454
  %v2053 = vpop.f32.mrb[0].mxu0
  %v2054 = vadd.f32 %v1970, %v2053
  %v2055 = vpop.f32.mrb[0].mxu0
  %2056 = vmatprep.mubr.f32.mxu0 0.0
  %2057 = vmatmul.mubr.f32.gmra.mrb[0].mxu0 %v1556
  %v2058 = vpop.f32.mrb[0].mxu0
  %v2059 = vadd.f32 %v1970, %v2058
  %v2060 = vpop.f32.mrb[0].mxu0
  %2061 = vmatprep.mubr.f32.mxu0 0.0
  %2062 = vmatmul.mubr.f32.gmra.mrb[0].mxu0 %v1658
  %v2063 = vpop.f32.mrb[0].mxu0
  %v2064 = vadd.f32 %v1970, %v2063
  %v2065 = vpop.f32.mrb[0].mxu0
  %2066 = vmatprep.mubr.f32.mxu0 0.0
  %2067 = vmatmul.mubr.f32.gmra.mrb[0].mxu0 %v1760
  %v2068 = vpop.f32.mrb[0].mxu0
  %v2069 = vadd.f32 %v1970, %v2068
  %v2070 = vpop.f32.mrb[0].mxu0
  %2071 = vmatprep.mubr.f32.mxu0 0.0
  %2072 = vmatmul.mubr.f32.gmra.mrb[0].mxu0 %v1862
  %v2073 = vpop.f32.mrb[0].mxu0
  %v2074 = vadd.f32 %v1970, %v2073
  %v2075 = vpop.f32.mrb[0].mxu0
  %2076 = vmatprep.mubr.f32.mxu0 0.0
  %2077 = vmatmul.mubr.f32.gmra.mrb[0].mxu0 %v1975
  %v2078 = vpop.f32.mrb[0].mxu0
  %v2079 = vadd.f32 %v1970, %v2078
  %v2080 = vpop.f32.mrb[0].mxu0
  %2081 = vdwg.mxu0
  %v2082 = vxor.u32 %v2044, 2147483648
  %v2083 = vxor.u32 %v2049, 2147483648
  %v2084 = vxor.u32 %v2054, 2147483648
  %v2085 = vxor.u32 %v2059, 2147483648
  %v2086 = vxor.u32 %v2064, 2147483648
  %v2087 = vxor.u32 %v2069, 2147483648
  %v2088 = vxor.u32 %v2074, 2147483648
  %v2089 = vxor.u32 %v2079, 2147483648
  %v2090 = vmul.f32 %v2082, 1.442695
  %v2091 = vpow.pop %v2090
  %v2092 = vmul.f32 %v2083, 1.442695
  %v2093 = vpow.pop %v2092
  %v2094 = vmul.f32 %v2084, 1.442695
  %v2095 = vpow.pop %v2094
  %v2096 = vmul.f32 %v2085, 1.442695
  %v2097 = vpow.pop %v2096
  %v2098 = vmul.f32 %v2086, 1.442695
  %v2099 = vpow.pop %v2098
  %v2100 = vmul.f32 %v2087, 1.442695
  %v2101 = vpow.pop %v2100
  %v2102 = vmul.f32 %v2088, 1.442695
  %v2103 = vpow.pop %v2102
  %v2104 = vmul.f32 %v2089, 1.442695
  %v2105 = vpow.pop %v2104
  %v2106 = vadd.f32 %v2091, 1.0
  %v2107 = vadd.f32 %v2093, 1.0
  %v2108 = vadd.f32 %v2095, 1.0
  %v2109 = vadd.f32 %v2097, 1.0
  %v2110 = vadd.f32 %v2099, 1.0
  %v2111 = vadd.f32 %v2101, 1.0
  %v2112 = vadd.f32 %v2103, 1.0
  %v2113 = vadd.f32 %v2105, 1.0
  %v2114 = vrcp.pop %v2106
  %v2115 = vmul.f32 1.0, %v2114
  %v2116 = vrcp.pop %v2107
  %v2117 = vmul.f32 1.0, %v2116
  %v2118 = vrcp.pop %v2108
  %v2119 = vmul.f32 1.0, %v2118
  %v2120 = vrcp.pop %v2109
  %v2121 = vmul.f32 1.0, %v2120
  %v2122 = vrcp.pop %v2110
  %v2123 = vmul.f32 1.0, %v2122
  %v2124 = vrcp.pop %v2111
  %v2125 = vmul.f32 1.0, %v2124
  %v2126 = vrcp.pop %v2112
  %v2127 = vmul.f32 1.0, %v2126
  %v2128 = vrcp.pop %v2113
  %v2129 = vmul.f32 1.0, %v2128
  %2131 = vrot.lane.b32.xlu0 %v2117, 32
  %v2132 = vpop.permute.xlu0 %2131
  %2135 = vrot.lane.b32.xlu0 %v2119, 64
  %v2136 = vpop.permute.xlu0 %2135
  %2139 = vrot.lane.b32.xlu0 %v2121, 96
  %v2140 = vpop.permute.xlu0 %2139
  %2143 = vrot.lane.b32.xlu0 %v2125, 32
  %v2144 = vpop.permute.xlu0 %2143
  %2147 = vrot.lane.b32.xlu0 %v2127, 64
  %v2148 = vpop.permute.xlu0 %2147
  %2151 = vrot.lane.b32.xlu0 %v2129, 96
  %v2152 = vpop.permute.xlu0 %2151
  %v2154 = vsel %vm193, %v2115, %v2132
  %vm2155 = vcmask 523264
  %v2156 = vsel %vm2155, %v2154, %v2136
  %vm2157 = vcmask 785408
  %v2158 = vsel %vm2157, %v2156, %v2140
  %v2159 = vsel %vm193, %v2123, %v2144
  %v2160 = vsel %vm2155, %v2159, %v2148
  %v2161 = vsel %vm2157, %v2160, %v2152
  %2162 = vst [vmem:[%s11] sm:$0xff] %v2158
  %2163 = vst [vmem:[%s11 + $0x8] sm:$0xff] %v2161
  // Predicated region
  $region46: #{embedder_forward.1} parent=0 // pred_check
    _
  $region47: #{embedder_forward.1} parent=0 // pred_check_branch
    %2165 = sbr.rel (0) target = $region49
  $region48: #{embedder_forward.1} parent=0 // pred_region
    _
  $region49: #{embedder_forward.1} parent=0 // pred_fallthru
    _
  // Predicated region
  $region50: #{embedder_forward.1} parent=0 // pred_check
    _
  $region51: #{embedder_forward.1} parent=0 // pred_check_branch
    %2167 = sbr.rel (0) target = $region53
  $region52: #{embedder_forward.1} parent=0 // pred_region
    _
  $region53: #{embedder_forward.1} parent=0 // pred_fallthru
    _

</llo_original>
